<compile_context>
chip_gen: v7x
topology: tpu7x:2x2x1
jax: 0.10.0
libtpu: 0.0.40
codegen_flags: <defaults>
</compile_context>

<pallas_src>
import functools

import jax
import jax.numpy as jnp
from jax.experimental import pallas as pl
from jax.experimental.pallas import tpu as pltpu


def _round_up(v, m):
    return ((v + m - 1) // m) * m


def _lau_kernel_mask(x_ref, mask_ref, w1_ref, b1_ref, w2_ref, b2_ref, o_ref, *, alpha):
    """(x@W1)*m + b1 -> lrelu -> (h@W2)*m + b2 -> lrelu -> *m   (m is per-row)."""
    m = mask_ref[...].astype(jnp.float32)                       # (TM, 1), reused 3x
    # (x*m) @ W1 == (x @ W1) * m for a per-row mask: MXU eats x straight from DMA.
    h = jnp.dot(x_ref[...], w1_ref[...],
                preferred_element_type=jnp.float32) * m + b1_ref[...]
    h = jnp.maximum(h, alpha * h)                               # LeakyReLU (0 < alpha < 1)
    # (h*m) @ W2 == (h @ W2) * m: fold the second mask into the f32 epilogue too.
    o = jnp.dot(h.astype(w2_ref.dtype), w2_ref[...],
                preferred_element_type=jnp.float32) * m + b2_ref[...]
    o = jnp.maximum(o, alpha * o)
    o_ref[...] = (o * m).astype(o_ref.dtype)


def _lau_kernel_nomask(x_ref, w1_ref, b1_ref, w2_ref, b2_ref, o_ref, *, alpha):
    """linear1 -> leaky_relu -> linear2 -> leaky_relu (no mask traffic at all)."""
    h = jnp.dot(x_ref[...], w1_ref[...],
                preferred_element_type=jnp.float32) + b1_ref[...]
    h = jnp.maximum(h, alpha * h)
    o = jnp.dot(h.astype(w2_ref.dtype), w2_ref[...],
                preferred_element_type=jnp.float32) + b2_ref[...]
    o = jnp.maximum(o, alpha * o)
    o_ref[...] = o.astype(o_ref.dtype)


def _vmem_capacity_bytes():
    try:
        return int(pltpu.get_tpu_info().vmem_capacity_bytes)
    except Exception:
        return 128 * 1024 * 1024          # v5e/v6e-style default if the query fails


def leaky_awareness_unit(x, w1, b1, w2, b2, attention_mask=None, *,
                         alpha=0.01, row_tile=None, compute_dtype=None,
                         single_buffer_weights=True):
    """Pallas implementation of LeakyAwarenessUnit.forward.

    Args:
      x:  (batch, seq, input_dim) array.
      w1: (input_dim, hidden_dim)   b1: (hidden_dim,)
      w2: (hidden_dim, input_dim)   b2: (input_dim,)
      attention_mask: optional (batch, seq, 1) array (or None).
      row_tile: rows per grid step (None = auto, hardware-aware).
      compute_dtype: MXU operand dtype (None = x.dtype; jnp.bfloat16 for the
        fast MXU path — changes numerics slightly, opt-in).
    Returns:
      (batch, seq, input_dim) array, same dtype as x.
    """
    B, S, D_in = x.shape
    H = w1.shape[1]
    M = B * S

    cdt = jnp.dtype(compute_dtype) if compute_dtype is not None else jnp.dtype(x.dtype)
    csz = jnp.dtype(cdt).itemsize
    osz = jnp.dtype(x.dtype).itemsize

    # Lane-dense feature padding (multiples of 128).  K-padding of x MUST be zeros.
    D_pad = _round_up(D_in, 128)
    H_pad = _round_up(H, 128)
    has_mask = attention_mask is not None

    # ---- VMEM budget & row-tile selection (generation aware) -----------------
    vmem_cap = _vmem_capacity_bytes()
    vmem_limit = (vmem_cap * 3) // 4                     # headroom for Mosaic scratch

    def _vmem_estimate(rt):
        wbuf = 1 if single_buffer_weights else 2
        per_step = rt * D_pad * (csz + osz) * 2          # double-buffered x / out tiles
        if has_mask:
            per_step += rt * 128 * 4 * 2                 # lane-padded (rt, 1) f32 mask
        scratch = rt * (H_pad + D_pad) * 4               # f32 matmul accumulators
        weights = (2 * D_pad * H_pad * csz + (H_pad + D_pad) * 4) * wbuf
        return per_step + scratch + weights

    if row_tile is None:
        rt = 1024 if vmem_cap >= (100 << 20) else 512    # v5e/v6e (128 MiB) vs v7x (64 MiB)
        rt = min(rt, _round_up(M, 8))
        if M > 8:                                        # >= 2 grid steps: v7x has 2 TCs
            rt = min(rt, _round_up(pl.cdiv(M, 2), 8))
        while rt > 8 and _vmem_estimate(rt) > (vmem_limit * 4) // 5:
            rt = max(8, _round_up(rt // 2, 8))
    else:
        rt = max(8, min(_round_up(int(row_tile), 8), _round_up(M, 8)))
    row_tile = rt
    grid = (pl.cdiv(M, row_tile),)                       # no M-padding: partial last block

    # ---- operand prep (feature padding only; no row padding, no extra copies) -
    x2 = x.reshape(M, D_in)
    if x2.dtype != cdt:
        x2 = x2.astype(cdt)
    if D_pad != D_in:
        x2 = jnp.pad(x2, ((0, 0), (0, D_pad - D_in)))    # zeroed K lanes (correctness)

    w1p = w1.astype(cdt)
    w2p = w2.astype(cdt)
    if D_pad != D_in or H_pad != H:
        w1p = jnp.pad(w1p, ((0, D_pad - D_in), (0, H_pad - H)))
        w2p = jnp.pad(w2p, ((0, H_pad - H), (0, D_pad - D_in)))
    b1p = jnp.pad(b1.astype(jnp.float32), (0, H_pad - H)).reshape(1, H_pad)
    b2p = jnp.pad(b2.astype(jnp.float32), (0, D_pad - D_in)).reshape(1, D_pad)

    cost = pl.CostEstimate(
        flops=4 * M * D_pad * H_pad,
        transcendentals=0,
        bytes_accessed=int(M * D_pad * (csz + osz)
                           + 2 * D_pad * H_pad * csz
                           + (H_pad + D_pad) * 4
                           + (M * 4 if has_mask else 0)),
    )

    x_spec = pl.BlockSpec((row_tile, D_pad), lambda i: (i, 0))
    out_spec = pl.BlockSpec((row_tile, D_pad), lambda i: (i, 0))

    def _weight_specs(single_buffered):
        # Constant index_map -> block fetched exactly once; a second pipeline
        # buffer would be pure VMEM waste, so request single buffering.
        # TODO(synk): if 2*D_pad*H_pad stops fitting VMEM (huge D*H on v7x), stream
        # W1 column-panels / W2 row-panels over a second "arbitrary" grid axis.
        shapes = [(D_pad, H_pad), (1, H_pad), (H_pad, D_pad), (1, D_pad)]
        if single_buffered:
            return [pl.BlockSpec(s, lambda i: (0, 0), pipeline_mode=pl.Buffered(1))
                    for s in shapes]
        return [pl.BlockSpec(s, lambda i: (0, 0)) for s in shapes]

    if has_mask:
        mask2 = attention_mask.reshape(M, 1).astype(jnp.float32)
        kernel = functools.partial(_lau_kernel_mask, alpha=alpha)
        data_specs = [x_spec, pl.BlockSpec((row_tile, 1), lambda i: (i, 0))]
        args = (x2, mask2, w1p, b1p, w2p, b2p)
    else:
        kernel = functools.partial(_lau_kernel_nomask, alpha=alpha)
        data_specs = [x_spec]
        args = (x2, w1p, b1p, w2p, b2p)

    def _call(single_buffered):
        return pl.pallas_call(
            kernel,
            out_shape=jax.ShapeDtypeStruct((M, D_pad), x.dtype),
            grid_spec=pltpu.PrefetchScalarGridSpec(
                num_scalar_prefetch=0,
                grid=grid,
                in_specs=data_specs + _weight_specs(single_buffered),
                out_specs=out_spec,
            ),
            compiler_params=pltpu.CompilerParams(
                dimension_semantics=("parallel",),       # megacore shard on v7x
                vmem_limit_bytes=int(vmem_limit),
            ),
            cost_estimate=cost,
        )(*args)

    if single_buffer_weights:
        try:
            out = _call(True)
        except Exception:
            # Installed JAX rejected Buffered(1) on a top-level BlockSpec; fall back
            # to default double-buffered weights (identical results, more VMEM).
            out = _call(False)
    else:
        out = _call(False)

    if D_pad != D_in:
        out = out[:, :D_in]
    return out.reshape(B, S, D_in)


def _reference(x, w1, b1, w2, b2, mask, alpha):
    """Pure-JAX reference mirroring the PyTorch forward (f32 math)."""
    def lrelu(v):
        return jnp.where(v >= 0, v, alpha * v)
    xf = x.astype(jnp.float32)
    if mask is not None:
        xf = xf * mask
    h = lrelu(xf @ w1.astype(jnp.float32) + b1)
    if mask is not None:
        h = h * mask
    o = lrelu(h @ w2.astype(jnp.float32) + b2)
    if mask is not None:
        o = o * mask
    return o.astype(x.dtype)


if __name__ == "__main__":
    alpha = 0.01
    key = jax.random.PRNGKey(0)
    kx, km, k1, k2, k3, k4, kx2, km2 = jax.random.split(key, 8)

    # --- small shape consistent with the module ---
    batch, seq, input_dim, hidden_dim = 2, 8, 32, 64
    x = jax.random.normal(kx, (batch, seq, input_dim), dtype=jnp.float32)
    attention_mask = (jax.random.uniform(km, (batch, seq, 1)) > 0.2).astype(jnp.float32)

    lim1 = 1.0 / jnp.sqrt(input_dim)
    lim2 = 1.0 / jnp.sqrt(hidden_dim)
    w1 = jax.random.uniform(k1, (input_dim, hidden_dim), minval=-lim1, maxval=lim1)
    b1 = jax.random.uniform(k2, (hidden_dim,), minval=-lim1, maxval=lim1)
    w2 = jax.random.uniform(k3, (hidden_dim, input_dim), minval=-lim2, maxval=lim2)
    b2 = jax.random.uniform(k4, (input_dim,), minval=-lim2, maxval=lim2)

    out = jax.block_until_ready(
        leaky_awareness_unit(x, w1, b1, w2, b2, attention_mask, alpha=alpha))
    ref = _reference(x, w1, b1, w2, b2, attention_mask, alpha)
    assert out.shape == (batch, seq, input_dim)
    assert jnp.allclose(out, ref, atol=1e-5, rtol=1e-5)

    # mask=None path (specialized kernel, no mask DMA)
    out_nm = jax.block_until_ready(
        leaky_awareness_unit(x, w1, b1, w2, b2, None, alpha=alpha))
    assert jnp.allclose(out_nm, _reference(x, w1, b1, w2, b2, None, alpha),
                        atol=1e-5, rtol=1e-5)

    # shape exercising feature padding, a non-divisible trailing row block, and
    # multiple grid steps with an explicit row_tile
    b_, s_, d_, h_ = 3, 100, 48, 96
    x_big = jax.random.normal(kx2, (b_, s_, d_), dtype=jnp.float32)
    m_big = (jax.random.uniform(km2, (b_, s_, 1)) > 0.3).astype(jnp.float32)
    w1b = jax.random.uniform(k1, (d_, h_), minval=-0.1, maxval=0.1)
    b1b = jax.random.uniform(k2, (h_,), minval=-0.1, maxval=0.1)
    w2b = jax.random.uniform(k3, (h_, d_), minval=-0.1, maxval=0.1)
    b2b = jax.random.uniform(k4, (d_,), minval=-0.1, maxval=0.1)
    out_big = jax.block_until_ready(
        leaky_awareness_unit(x_big, w1b, b1b, w2b, b2b, m_big,
                             alpha=alpha, row_tile=128))
    ref_big = _reference(x_big, w1b, b1b, w2b, b2b, m_big, alpha)
    assert jnp.allclose(out_big, ref_big, atol=1e-5, rtol=1e-5)

    # opt-in bf16 MXU operands (native-MXU fast path); looser tolerance vs f32 ref
    out_bf16 = jax.block_until_ready(
        leaky_awareness_unit(x, w1, b1, w2, b2, attention_mask, alpha=alpha,
                             compute_dtype=jnp.bfloat16))
    assert jnp.allclose(out_bf16, ref, atol=5e-2, rtol=5e-2)

    print("KERNEL_OK")
</pallas_src>

<mosaic_0001>
module attributes {stable_mosaic.version = 11 : i64} {
  func.func @_lau_kernel_mask(%arg0: i32, %arg1: memref<8x128xf32, #tpu.memory_space<vmem>>, %arg2: memref<8x1xf32, #tpu.memory_space<vmem>>, %arg3: memref<128x128xf32, #tpu.memory_space<vmem>>, %arg4: memref<1x128xf32, #tpu.memory_space<vmem>>, %arg5: memref<128x128xf32, #tpu.memory_space<vmem>>, %arg6: memref<1x128xf32, #tpu.memory_space<vmem>>, %arg7: memref<8x128xf32, #tpu.memory_space<vmem>>) attributes {dimension_semantics = [#tpu.dimension_semantics<parallel>], iteration_bounds = array<i64: 2>, scalar_prefetch = 0 : i64, scratch_operands = 0 : i64, tpu.core_type = #tpu.core_type<tc>, window_params = [{transform_indices = @transform_0, window_bounds = array<i64: 8, 128>}, {transform_indices = @transform_1, window_bounds = array<i64: 8, 1>}, {pipeline_mode = #tpu.pipeline_mode<synchronous>, transform_indices = @transform_2, window_bounds = array<i64: 128, 128>}, {pipeline_mode = #tpu.pipeline_mode<synchronous>, transform_indices = @transform_3, window_bounds = array<i64: 1, 128>}, {pipeline_mode = #tpu.pipeline_mode<synchronous>, transform_indices = @transform_4, window_bounds = array<i64: 128, 128>}, {pipeline_mode = #tpu.pipeline_mode<synchronous>, transform_indices = @transform_5, window_bounds = array<i64: 1, 128>}, {transform_indices = @transform_6, window_bounds = array<i64: 8, 128>}]} {
    %c0 = arith.constant 0 : index
    %c0_0 = arith.constant 0 : index
    %0 = vector.load %arg2[%c0, %c0_0] : memref<8x1xf32, #tpu.memory_space<vmem>>, vector<8x1xf32>
    %c0_1 = arith.constant 0 : index
    %c0_2 = arith.constant 0 : index
    %1 = vector.load %arg1[%c0_1, %c0_2] : memref<8x128xf32, #tpu.memory_space<vmem>>, vector<8x128xf32>
    %c0_3 = arith.constant 0 : index
    %c0_4 = arith.constant 0 : index
    %2 = vector.load %arg3[%c0_3, %c0_4] : memref<128x128xf32, #tpu.memory_space<vmem>>, vector<128x128xf32>
    %cst = arith.constant dense<0.000000e+00> : vector<8x128xf32>
    %3 = tpu.matmul %1, %2, %cst {dimension_numbers = #tpu.dot_dimension_numbers<[1], [0], [0], [1], [0, 0, 1, 1], [], []>} : vector<8x128xf32>, vector<128x128xf32>, vector<8x128xf32> -> vector<8x128xf32>
    %4 = vector.broadcast %0 : vector<8x1xf32> to vector<8x128xf32>
    %5 = arith.mulf %3, %4 : vector<8x128xf32>
    %c0_5 = arith.constant 0 : index
    %c0_6 = arith.constant 0 : index
    %6 = vector.load %arg4[%c0_5, %c0_6] : memref<1x128xf32, #tpu.memory_space<vmem>>, vector<1x128xf32>
    %7 = vector.broadcast %6 : vector<1x128xf32> to vector<8x128xf32>
    %8 = arith.addf %5, %7 : vector<8x128xf32>
    %cst_7 = arith.constant 0.00999999977 : f32
    %9 = vector.broadcast %cst_7 : f32 to vector<8x128xf32>
    %10 = arith.mulf %9, %8 : vector<8x128xf32>
    %11 = arith.maximumf %8, %10 : vector<8x128xf32>
    %c0_8 = arith.constant 0 : index
    %c0_9 = arith.constant 0 : index
    %12 = vector.load %arg5[%c0_8, %c0_9] : memref<128x128xf32, #tpu.memory_space<vmem>>, vector<128x128xf32>
    %cst_10 = arith.constant dense<0.000000e+00> : vector<8x128xf32>
    %13 = tpu.matmul %11, %12, %cst_10 {dimension_numbers = #tpu.dot_dimension_numbers<[1], [0], [0], [1], [0, 0, 1, 1], [], []>} : vector<8x128xf32>, vector<128x128xf32>, vector<8x128xf32> -> vector<8x128xf32>
    %14 = vector.broadcast %0 : vector<8x1xf32> to vector<8x128xf32>
    %15 = arith.mulf %13, %14 : vector<8x128xf32>
    %c0_11 = arith.constant 0 : index
    %c0_12 = arith.constant 0 : index
    %16 = vector.load %arg6[%c0_11, %c0_12] : memref<1x128xf32, #tpu.memory_space<vmem>>, vector<1x128xf32>
    %17 = vector.broadcast %16 : vector<1x128xf32> to vector<8x128xf32>
    %18 = arith.addf %15, %17 : vector<8x128xf32>
    %cst_13 = arith.constant 0.00999999977 : f32
    %19 = vector.broadcast %cst_13 : f32 to vector<8x128xf32>
    %20 = arith.mulf %19, %18 : vector<8x128xf32>
    %21 = arith.maximumf %18, %20 : vector<8x128xf32>
    %22 = vector.broadcast %0 : vector<8x1xf32> to vector<8x128xf32>
    %23 = arith.mulf %21, %22 : vector<8x128xf32>
    %c0_14 = arith.constant 0 : index
    %c0_15 = arith.constant 0 : index
    %24 = vector.load %arg7[%c0_14, %c0_15] : memref<8x128xf32, #tpu.memory_space<vmem>>, vector<8x128xf32>
    tpu.vector_store %arg7[%c0_14, %c0_15], %23 {strides = array<i32>} : memref<8x128xf32, #tpu.memory_space<vmem>>, vector<8x128xf32>,
    return
  }
  func.func @transform_0(%arg0: i32) -> (i32, i32) {
    %c0_i32 = arith.constant 0 : i32
    %c0_i32_0 = arith.constant 0 : i32
    return %arg0, %c0_i32 : i32, i32
  }
  func.func @transform_1(%arg0: i32) -> (i32, i32) {
    %c0_i32 = arith.constant 0 : i32
    %c0_i32_0 = arith.constant 0 : i32
    return %arg0, %c0_i32 : i32, i32
  }
  func.func @transform_2(%arg0: i32) -> (i32, i32) {
    %c0_i32 = arith.constant 0 : i32
    %c0_i32_0 = arith.constant 0 : i32
    %c0_i32_1 = arith.constant 0 : i32
    return %c0_i32, %c0_i32_0 : i32, i32
  }
  func.func @transform_3(%arg0: i32) -> (i32, i32) {
    %c0_i32 = arith.constant 0 : i32
    %c0_i32_0 = arith.constant 0 : i32
    %c0_i32_1 = arith.constant 0 : i32
    return %c0_i32, %c0_i32_0 : i32, i32
  }
  func.func @transform_4(%arg0: i32) -> (i32, i32) {
    %c0_i32 = arith.constant 0 : i32
    %c0_i32_0 = arith.constant 0 : i32
    %c0_i32_1 = arith.constant 0 : i32
    return %c0_i32, %c0_i32_0 : i32, i32
  }
  func.func @transform_5(%arg0: i32) -> (i32, i32) {
    %c0_i32 = arith.constant 0 : i32
    %c0_i32_0 = arith.constant 0 : i32
    %c0_i32_1 = arith.constant 0 : i32
    return %c0_i32, %c0_i32_0 : i32, i32
  }
  func.func @transform_6(%arg0: i32) -> (i32, i32) {
    %c0_i32 = arith.constant 0 : i32
    %c0_i32_0 = arith.constant 0 : i32
    return %arg0, %c0_i32 : i32, i32
  }
}

module attributes {stable_mosaic.version = 11 : i64} {
  func.func @_lau_kernel_mask(%arg0: i32, %arg1: memref<8x128xf32, #tpu.memory_space<vmem>>, %arg2: memref<8x1xf32, #tpu.memory_space<vmem>>, %arg3: memref<128x128xf32, #tpu.memory_space<vmem>>, %arg4: memref<1x128xf32, #tpu.memory_space<vmem>>, %arg5: memref<128x128xf32, #tpu.memory_space<vmem>>, %arg6: memref<1x128xf32, #tpu.memory_space<vmem>>, %arg7: memref<8x128xf32, #tpu.memory_space<vmem>>) attributes {dimension_semantics = [#tpu.dimension_semantics<parallel>], iteration_bounds = array<i64: 2>, scalar_prefetch = 0 : i64, scratch_operands = 0 : i64, tpu.core_type = #tpu.core_type<tc>, window_params = [{transform_indices = @transform_0, window_bounds = array<i64: 8, 128>}, {transform_indices = @transform_1, window_bounds = array<i64: 8, 1>}, {pipeline_mode = #tpu.pipeline_mode<synchronous>, transform_indices = @transform_2, window_bounds = array<i64: 128, 128>}, {pipeline_mode = #tpu.pipeline_mode<synchronous>, transform_indices = @transform_3, window_bounds = array<i64: 1, 128>}, {pipeline_mode = #tpu.pipeline_mode<synchronous>, transform_indices = @transform_4, window_bounds = array<i64: 128, 128>}, {pipeline_mode = #tpu.pipeline_mode<synchronous>, transform_indices = @transform_5, window_bounds = array<i64: 1, 128>}, {transform_indices = @transform_6, window_bounds = array<i64: 8, 128>}]} {
    %c0 = arith.constant 0 : index
    %c0_0 = arith.constant 0 : index
    %0 = vector.load %arg2[%c0, %c0_0] : memref<8x1xf32, #tpu.memory_space<vmem>>, vector<8x1xf32>
    %c0_1 = arith.constant 0 : index
    %c0_2 = arith.constant 0 : index
    %1 = vector.load %arg1[%c0_1, %c0_2] : memref<8x128xf32, #tpu.memory_space<vmem>>, vector<8x128xf32>
    %c0_3 = arith.constant 0 : index
    %c0_4 = arith.constant 0 : index
    %2 = vector.load %arg3[%c0_3, %c0_4] : memref<128x128xf32, #tpu.memory_space<vmem>>, vector<128x128xf32>
    %cst = arith.constant dense<0.000000e+00> : vector<8x128xf32>
    %3 = tpu.matmul %1, %2, %cst {dimension_numbers = #tpu.dot_dimension_numbers<[1], [0], [0], [1], [0, 0, 1, 1], [], []>} : vector<8x128xf32>, vector<128x128xf32>, vector<8x128xf32> -> vector<8x128xf32>
    %4 = vector.broadcast %0 : vector<8x1xf32> to vector<8x128xf32>
    %5 = arith.mulf %3, %4 : vector<8x128xf32>
    %c0_5 = arith.constant 0 : index
    %c0_6 = arith.constant 0 : index
    %6 = vector.load %arg4[%c0_5, %c0_6] : memref<1x128xf32, #tpu.memory_space<vmem>>, vector<1x128xf32>
    %7 = vector.broadcast %6 : vector<1x128xf32> to vector<8x128xf32>
    %8 = arith.addf %5, %7 : vector<8x128xf32>
    %cst_7 = arith.constant 0.00999999977 : f32
    %9 = vector.broadcast %cst_7 : f32 to vector<8x128xf32>
    %10 = arith.mulf %9, %8 : vector<8x128xf32>
    %11 = arith.maximumf %8, %10 : vector<8x128xf32>
    %c0_8 = arith.constant 0 : index
    %c0_9 = arith.constant 0 : index
    %12 = vector.load %arg5[%c0_8, %c0_9] : memref<128x128xf32, #tpu.memory_space<vmem>>, vector<128x128xf32>
    %cst_10 = arith.constant dense<0.000000e+00> : vector<8x128xf32>
    %13 = tpu.matmul %11, %12, %cst_10 {dimension_numbers = #tpu.dot_dimension_numbers<[1], [0], [0], [1], [0, 0, 1, 1], [], []>} : vector<8x128xf32>, vector<128x128xf32>, vector<8x128xf32> -> vector<8x128xf32>
    %14 = vector.broadcast %0 : vector<8x1xf32> to vector<8x128xf32>
    %15 = arith.mulf %13, %14 : vector<8x128xf32>
    %c0_11 = arith.constant 0 : index
    %c0_12 = arith.constant 0 : index
    %16 = vector.load %arg6[%c0_11, %c0_12] : memref<1x128xf32, #tpu.memory_space<vmem>>, vector<1x128xf32>
    %17 = vector.broadcast %16 : vector<1x128xf32> to vector<8x128xf32>
    %18 = arith.addf %15, %17 : vector<8x128xf32>
    %cst_13 = arith.constant 0.00999999977 : f32
    %19 = vector.broadcast %cst_13 : f32 to vector<8x128xf32>
    %20 = arith.mulf %19, %18 : vector<8x128xf32>
    %21 = arith.maximumf %18, %20 : vector<8x128xf32>
    %22 = vector.broadcast %0 : vector<8x1xf32> to vector<8x128xf32>
    %23 = arith.mulf %21, %22 : vector<8x128xf32>
    %c0_14 = arith.constant 0 : index
    %c0_15 = arith.constant 0 : index
    %24 = vector.load %arg7[%c0_14, %c0_15] : memref<8x128xf32, #tpu.memory_space<vmem>>, vector<8x128xf32>
    tpu.vector_store %arg7[%c0_14, %c0_15], %23 {strides = array<i32>} : memref<8x128xf32, #tpu.memory_space<vmem>>, vector<8x128xf32>,
    return
  }
  func.func @transform_0(%arg0: i32) -> (i32, i32) {
    %c0_i32 = arith.constant 0 : i32
    %c0_i32_0 = arith.constant 0 : i32
    return %arg0, %c0_i32 : i32, i32
  }
  func.func @transform_1(%arg0: i32) -> (i32, i32) {
    %c0_i32 = arith.constant 0 : i32
    %c0_i32_0 = arith.constant 0 : i32
    return %arg0, %c0_i32 : i32, i32
  }
  func.func @transform_2(%arg0: i32) -> (i32, i32) {
    %c0_i32 = arith.constant 0 : i32
    %c0_i32_0 = arith.constant 0 : i32
    %c0_i32_1 = arith.constant 0 : i32
    return %c0_i32, %c0_i32_0 : i32, i32
  }
  func.func @transform_3(%arg0: i32) -> (i32, i32) {
    %c0_i32 = arith.constant 0 : i32
    %c0_i32_0 = arith.constant 0 : i32
    %c0_i32_1 = arith.constant 0 : i32
    return %c0_i32, %c0_i32_0 : i32, i32
  }
  func.func @transform_4(%arg0: i32) -> (i32, i32) {
    %c0_i32 = arith.constant 0 : i32
    %c0_i32_0 = arith.constant 0 : i32
    %c0_i32_1 = arith.constant 0 : i32
    return %c0_i32, %c0_i32_0 : i32, i32
  }
  func.func @transform_5(%arg0: i32) -> (i32, i32) {
    %c0_i32 = arith.constant 0 : i32
    %c0_i32_0 = arith.constant 0 : i32
    %c0_i32_1 = arith.constant 0 : i32
    return %c0_i32, %c0_i32_0 : i32, i32
  }
  func.func @transform_6(%arg0: i32) -> (i32, i32) {
    %c0_i32 = arith.constant 0 : i32
    %c0_i32_0 = arith.constant 0 : i32
    return %arg0, %c0_i32 : i32, i32
  }
}

</mosaic_0001>

<llo_original>
// kernel: tpu_custom_call.1
$region0: #{tpu_custom_call.1}
  #allocation0 [shape = 'u32[]', space=smem, size = 0x4, offset = 0x4, fixed_abs, tag = 'smem constant byte address 0x4 - core index']
  #allocation1 [shape = 'u32[144,128]{1,0:T(1,128)}', space=vmem, size = 0x12000, scoped, tag = 'internal scratch']
  %s0 = inlined_call_operand.hbm [shape: f32[16,128], index: 0, kind: input, shape index: {}]
  %s1 = inlined_call_operand.hbm [shape: f32[16,1], index: 1, kind: input, shape index: {}]
  %s2 = inlined_call_operand.hbm [shape: f32[128,128], index: 2, kind: input, shape index: {}]
  %s3 = inlined_call_operand.hbm [shape: f32[1,128], index: 3, kind: input, shape index: {}]
  %s4 = inlined_call_operand.hbm [shape: f32[128,128], index: 4, kind: input, shape index: {}]
  %s5 = inlined_call_operand.hbm [shape: f32[1,128], index: 5, kind: input, shape index: {}]
  %s6 = inlined_call_operand.hbm [shape: f32[16,128], index: 6, kind: output, shape index: {}]
  %s7 = sld [smem:[#allocation0]]
  $region81: #{tpu_custom_call.1} parent=0
    _
  %s9 = ssub.s32 1, %s7
  %s10 = scalar_select 0, %s9, %s7
  $region1: #{tpu_custom_call.1} parent=0
    #allocation2 [shape = 'u8[8192]{0}', space=vmem, size = 0x2000, scoped, tag = 'input window, operand 0']
    #allocation3 [shape = 's32[2]{0}', space=sflag, size = 0x8, scoped, tag = 'scoped memory for tpu_custom_call.1']
    #allocation4 [shape = 's32[2]{0}', space=sflag, size = 0x8, scoped, tag = 'scoped memory for tpu_custom_call.1']
    #allocation5 [shape = 'u8[8192]{0}', space=vmem, size = 0x2000, scoped, tag = 'input window, operand 1']
    #allocation6 [shape = 's32[2]{0}', space=sflag, size = 0x8, scoped, tag = 'scoped memory for tpu_custom_call.1']
    #allocation7 [shape = 'u8[65536]{0}', space=vmem, size = 0x10000, scoped, tag = 'input window, operand 2, single buffered']
    #allocation8 [shape = 'u8[512]{0}', space=vmem, size = 0x400, scoped, tag = 'input window, operand 3, single buffered']
    #allocation9 [shape = 's32[1]{0}', space=sflag, size = 0x4, scoped, tag = 'scoped memory for tpu_custom_call.1']
    #allocation10 [shape = 'u8[65536]{0}', space=vmem, size = 0x10000, scoped, tag = 'input window, operand 4, single buffered']
    #allocation11 [shape = 'u8[512]{0}', space=vmem, size = 0x400, scoped, tag = 'input window, operand 5, single buffered']
    #allocation12 [shape = 's32[1]{0}', space=sflag, size = 0x4, scoped, tag = 'scoped memory for tpu_custom_call.1']
    #allocation13 [shape = 'u8[8192]{0}', space=vmem, size = 0x2000, scoped, tag = 'output window, operand 0']
    %11 = vsyncpa [#allocation3], 0
    %s12 = scalar_lea.sflag [#allocation3], 1
    %13 = vsyncpa %s12, 0
    %14 = vsyncpa [#allocation6], 0
    %s15 = scalar_lea.sflag [#allocation6], 1
    %16 = vsyncpa %s15, 0
    %17 = vsyncpa [#allocation9], 0
    %18 = vsyncpa [#allocation12], 0
    %19 = vsyncpa [#allocation4], 0
    %s20 = scalar_lea.sflag [#allocation4], 1
    %21 = vsyncpa %s20, 0
    loop: start=0, step=1, limit=4
    $region2: #{tpu_custom_call.1} parent=1 // loop_pre_header
      _
    $region3: #{tpu_custom_call.1} parent=1 // loop_header
      %s23 = sphi 0, %s27
      %p24 = scmp.ge.s32.totalorder %s23, 4
      %s33 = sphi 0, %s35
      %s36 = sphi 0, %s33
      %s37 = sphi 0, %s36
      %s53 = sphi 0, %s37
      %s59 = sphi 0, %s61
      %s62 = sphi 0, %s59
      %s63 = sphi 0, %s62
      %s79 = sphi 0, %s63
      %s83 = sphi 0, %s83
      %s85 = sphi 0, %s83
      %s86 = sphi 0, %s85
      %s100 = sphi 0, %s86
      %s104 = sphi 0, %s104
      %s106 = sphi 0, %s104
      %s107 = sphi 0, %s106
      %s121 = sphi 0, %s107
      %s125 = sphi 0, %s125
      %s127 = sphi 0, %s125
      %s128 = sphi 0, %s127
      %s142 = sphi 0, %s128
      %s146 = sphi 0, %s146
      %s148 = sphi 0, %s146
      %s149 = sphi 0, %s148
      %s163 = sphi 0, %s149
      %s169 = sphi 0, %s171
      %s172 = sphi 0, %s169
      %s173 = sphi 0, %s172
      %s189 = sphi 0, %s173
    $region4: #{tpu_custom_call.1} parent=1 // loop_header_branch
      %26 = sbr.rel (%p24) target = $region8
    $region5: #{tpu_custom_call.1} parent=1 // loop_body
      %s28 = ssub.s32 %s23, 1
      %s29 = ssub.s32 %s23, 2
      %s30 = sadd.s32 %s23, 1
      %s31 = ssub.s32 %s23, %s30
      %p32 = scmp.eq.s32.totalorder %s31, 0
      %s34 = sadd.s32 %s33, 1
      %s35 = scalar_select %p32, %s33, %s34
      %p38 = pneg %p32
      %p39 = scmp.eq.s32.totalorder %s23, 1
      %p40 = por %p38, %p39
      %p41 = scmp.ne.s32.totalorder %s33, %s36
      %p42 = scmp.eq.s32.totalorder %s23, 0
      %p43 = por %p41, %p42
      %p44 = scmp.ne.s32.totalorder %s33, %s36
      %p45 = scmp.eq.s32.totalorder %s28, 1
      %p46 = por %p44, %p45
      %p47 = scmp.ne.s32.totalorder %s36, %s37
      %p48 = scmp.eq.s32.totalorder %s28, 0
      %p49 = por %p47, %p48
      %p50 = scmp.ne.s32.totalorder %s36, %s37
      %p51 = scmp.eq.s32.totalorder %s29, 1
      %p52 = por %p50, %p51
      %p54 = scmp.ne.s32.totalorder %s37, %s53
      %p55 = scmp.eq.s32.totalorder %s29, 0
      %p56 = por %p54, %p55
      %s57 = ssub.s32 %s23, %s30
      %p58 = scmp.eq.s32.totalorder %s57, 0
      %s60 = sadd.s32 %s59, 1
      %s61 = scalar_select %p58, %s59, %s60
      %p64 = pneg %p58
      %p65 = scmp.eq.s32.totalorder %s23, 1
      %p66 = por %p64, %p65
      %p67 = scmp.ne.s32.totalorder %s59, %s62
      %p68 = scmp.eq.s32.totalorder %s23, 0
      %p69 = por %p67, %p68
      %p70 = scmp.ne.s32.totalorder %s59, %s62
      %p71 = scmp.eq.s32.totalorder %s28, 1
      %p72 = por %p70, %p71
      %p73 = scmp.ne.s32.totalorder %s62, %s63
      %p74 = scmp.eq.s32.totalorder %s28, 0
      %p75 = por %p73, %p74
      %p76 = scmp.ne.s32.totalorder %s62, %s63
      %p77 = scmp.eq.s32.totalorder %s29, 1
      %p78 = por %p76, %p77
      %p80 = scmp.ne.s32.totalorder %s63, %s79
      %p81 = scmp.eq.s32.totalorder %s29, 0
      %p82 = por %p80, %p81
      %s84 = sadd.s32 %s83, 1
      %p87 = scmp.eq.s32.totalorder %s23, 1
      %p88 = scmp.ne.s32.totalorder %s83, %s85
      %p89 = scmp.eq.s32.totalorder %s23, 0
      %p90 = por %p88, %p89
      %p91 = scmp.ne.s32.totalorder %s83, %s85
      %p92 = scmp.eq.s32.totalorder %s28, 1
      %p93 = por %p91, %p92
      %p94 = scmp.ne.s32.totalorder %s85, %s86
      %p95 = scmp.eq.s32.totalorder %s28, 0
      %p96 = por %p94, %p95
      %p97 = scmp.ne.s32.totalorder %s85, %s86
      %p98 = scmp.eq.s32.totalorder %s29, 1
      %p99 = por %p97, %p98
      %p101 = scmp.ne.s32.totalorder %s86, %s100
      %p102 = scmp.eq.s32.totalorder %s29, 0
      %p103 = por %p101, %p102
      %s105 = sadd.s32 %s104, 1
      %p108 = scmp.eq.s32.totalorder %s23, 1
      %p109 = scmp.ne.s32.totalorder %s104, %s106
      %p110 = scmp.eq.s32.totalorder %s23, 0
      %p111 = por %p109, %p110
      %p112 = scmp.ne.s32.totalorder %s104, %s106
      %p113 = scmp.eq.s32.totalorder %s28, 1
      %p114 = por %p112, %p113
      %p115 = scmp.ne.s32.totalorder %s106, %s107
      %p116 = scmp.eq.s32.totalorder %s28, 0
      %p117 = por %p115, %p116
      %p118 = scmp.ne.s32.totalorder %s106, %s107
      %p119 = scmp.eq.s32.totalorder %s29, 1
      %p120 = por %p118, %p119
      %p122 = scmp.ne.s32.totalorder %s107, %s121
      %p123 = scmp.eq.s32.totalorder %s29, 0
      %p124 = por %p122, %p123
      %s126 = sadd.s32 %s125, 1
      %p129 = scmp.eq.s32.totalorder %s23, 1
      %p130 = scmp.ne.s32.totalorder %s125, %s127
      %p131 = scmp.eq.s32.totalorder %s23, 0
      %p132 = por %p130, %p131
      %p133 = scmp.ne.s32.totalorder %s125, %s127
      %p134 = scmp.eq.s32.totalorder %s28, 1
      %p135 = por %p133, %p134
      %p136 = scmp.ne.s32.totalorder %s127, %s128
      %p137 = scmp.eq.s32.totalorder %s28, 0
      %p138 = por %p136, %p137
      %p139 = scmp.ne.s32.totalorder %s127, %s128
      %p140 = scmp.eq.s32.totalorder %s29, 1
      %p141 = por %p139, %p140
      %p143 = scmp.ne.s32.totalorder %s128, %s142
      %p144 = scmp.eq.s32.totalorder %s29, 0
      %p145 = por %p143, %p144
      %s147 = sadd.s32 %s146, 1
      %p150 = scmp.eq.s32.totalorder %s23, 1
      %p151 = scmp.ne.s32.totalorder %s146, %s148
      %p152 = scmp.eq.s32.totalorder %s23, 0
      %p153 = por %p151, %p152
      %p154 = scmp.ne.s32.totalorder %s146, %s148
      %p155 = scmp.eq.s32.totalorder %s28, 1
      %p156 = por %p154, %p155
      %p157 = scmp.ne.s32.totalorder %s148, %s149
      %p158 = scmp.eq.s32.totalorder %s28, 0
      %p159 = por %p157, %p158
      %p160 = scmp.ne.s32.totalorder %s148, %s149
      %p161 = scmp.eq.s32.totalorder %s29, 1
      %p162 = por %p160, %p161
      %p164 = scmp.ne.s32.totalorder %s149, %s163
      %p165 = scmp.eq.s32.totalorder %s29, 0
      %p166 = por %p164, %p165
      %s167 = ssub.s32 %s23, %s30
      %p168 = scmp.eq.s32.totalorder %s167, 0
      %s170 = sadd.s32 %s169, 1
      %s171 = scalar_select %p168, %s169, %s170
      %p174 = pneg %p168
      %p175 = scmp.eq.s32.totalorder %s23, 1
      %p176 = por %p174, %p175
      %p177 = scmp.ne.s32.totalorder %s169, %s172
      %p178 = scmp.eq.s32.totalorder %s23, 0
      %p179 = por %p177, %p178
      %p180 = scmp.ne.s32.totalorder %s169, %s172
      %p181 = scmp.eq.s32.totalorder %s28, 1
      %p182 = por %p180, %p181
      %p183 = scmp.ne.s32.totalorder %s172, %s173
      %p184 = scmp.eq.s32.totalorder %s28, 0
      %p185 = por %p183, %p184
      %p186 = scmp.ne.s32.totalorder %s172, %s173
      %p187 = scmp.eq.s32.totalorder %s29, 1
      %p188 = por %p186, %p187
      %p190 = scmp.ne.s32.totalorder %s173, %s189
      %p191 = scmp.eq.s32.totalorder %s29, 0
      %p192 = por %p190, %p191
      %p193 = scmp.le.s32.totalorder 1, %s23
      %p194 = scmp.lt.s32.totalorder %s23, 3
      %p195 = pnand %p193, %p194
      %p196 = pneg %p195
      // Predicated region
      $region9: #{tpu_custom_call.1} parent=5 // pred_check
        _
      $region10: #{tpu_custom_call.1} parent=5 // pred_check_branch
        %198 = sbr.rel (%p195) target = $region12
      $region11: #{tpu_custom_call.1} parent=5 // pred_region
        %s199 = ssub.s32 %s23, 1
        // Predicated region
        $region13: #{tpu_custom_call.1} parent=11 // pred_check
          %p200 = pneg %p96
        $region14: #{tpu_custom_call.1} parent=11 // pred_check_branch
          %202 = sbr.rel (%p200) target = $region16
        $region15: #{tpu_custom_call.1} parent=11 // pred_region
          %s204 = ssub.s32 2048, 2048
          %205 = vsyncadd [#allocation6], %s204
          %s206 = sshll.u32 [#allocation7], 4
          %s207 = int_to_ptr.vmem [resolvable:$true] %s206
          %212 = dma.hbm_to_vmem [thread:$0]  %s2, 2048, %s207, [#allocation6], 128, 128, 8
        $region16: #{tpu_custom_call.1} parent=11 // pred_fallthru
          _
        // Predicated region
        $region17: #{tpu_custom_call.1} parent=11 // pred_check
          %p213 = pneg %p117
        $region18: #{tpu_custom_call.1} parent=11 // pred_check_branch
          %215 = sbr.rel (%p213) target = $region20
        $region19: #{tpu_custom_call.1} parent=11 // pred_region
          %s217 = ssub.s32 16, 16
          %218 = vsyncadd [#allocation9], %s217
          %s220 = sshll.u32 [#allocation8], 4
          %s221 = int_to_ptr.vmem [resolvable:$true] %s220
          %223 = dma.hbm_to_vmem [thread:$0]  %s3, 16, %s221, [#allocation9]
        $region20: #{tpu_custom_call.1} parent=11 // pred_fallthru
          _
        // Predicated region
        $region21: #{tpu_custom_call.1} parent=11 // pred_check
          %p224 = pneg %p138
        $region22: #{tpu_custom_call.1} parent=11 // pred_check_branch
          %226 = sbr.rel (%p224) target = $region24
        $region23: #{tpu_custom_call.1} parent=11 // pred_region
          %s228 = ssub.s32 2048, 2048
          %229 = vsyncadd [#allocation9], %s228
          %s230 = sshll.u32 [#allocation10], 4
          %s231 = int_to_ptr.vmem [resolvable:$true] %s230
          %236 = dma.hbm_to_vmem [thread:$0]  %s4, 2048, %s231, [#allocation9], 128, 128, 8
        $region24: #{tpu_custom_call.1} parent=11 // pred_fallthru
          _
        // Predicated region
        $region25: #{tpu_custom_call.1} parent=11 // pred_check
          %p237 = pneg %p159
        $region26: #{tpu_custom_call.1} parent=11 // pred_check_branch
          %239 = sbr.rel (%p237) target = $region28
        $region27: #{tpu_custom_call.1} parent=11 // pred_region
          %s241 = ssub.s32 16, 16
          %242 = vsyncadd [#allocation12], %s241
          %s244 = sshll.u32 [#allocation11], 4
          %s245 = int_to_ptr.vmem [resolvable:$true] %s244
          %247 = dma.hbm_to_vmem [thread:$0]  %s5, 16, %s245, [#allocation12]
        $region28: #{tpu_custom_call.1} parent=11 // pred_fallthru
          _
      $region12: #{tpu_custom_call.1} parent=5 // pred_fallthru
        _
      %p248 = scmp.lt.s32.totalorder %s23, 2
      // Predicated region
      $region29: #{tpu_custom_call.1} parent=5 // pred_check
        %p249 = pneg %p248
      $region30: #{tpu_custom_call.1} parent=5 // pred_check_branch
        %251 = sbr.rel (%p249) target = $region32
      $region31: #{tpu_custom_call.1} parent=5 // pred_region
        // Predicated region
        $region33: #{tpu_custom_call.1} parent=31 // pred_check
          %p252 = pneg %p43
        $region34: #{tpu_custom_call.1} parent=31 // pred_check_branch
          %254 = sbr.rel (%p252) target = $region36
        $region35: #{tpu_custom_call.1} parent=31 // pred_region
          %s255 = sand.u32 %s33, 1
          %s256 = scalar_lea.sflag [#allocation3], %s255
          %s257 = sand.u32 %s33, 1
          %s258 = smul.addr %s257, 8
          %s259 = scalar_lea.vmem [#allocation2], %s258
          %s261 = ssub.s32 128, 128
          %262 = vsyncadd %s256, %s261
          %s263 = smul.addr %s23, 128
          %s264 = scalar_lea.hbm %s0, %s263
          %s266 = sshll.u32 %s259, 4
          %s267 = int_to_ptr.vmem [resolvable:$true] %s266
          %269 = dma.hbm_to_vmem [thread:$0]  %s264, 128, %s267, %s256
        $region36: #{tpu_custom_call.1} parent=31 // pred_fallthru
          _
        // Predicated region
        $region37: #{tpu_custom_call.1} parent=31 // pred_check
          %p270 = pneg %p69
        $region38: #{tpu_custom_call.1} parent=31 // pred_check_branch
          %272 = sbr.rel (%p270) target = $region40
        $region39: #{tpu_custom_call.1} parent=31 // pred_region
          %s273 = sand.u32 %s23, 1
          %s274 = scalar_lea.sflag [#allocation6], %s273
          %s275 = sand.u32 %s59, 1
          %s276 = smul.addr %s275, 8
          %s277 = scalar_lea.vmem [#allocation5], %s276
          %s279 = ssub.s32 128, 128
          %280 = vsyncadd %s274, %s279
          %s281 = smul.addr %s23, 128
          %s282 = scalar_lea.hbm %s1, %s281
          %s284 = sshll.u32 %s277, 4
          %s285 = int_to_ptr.vmem [resolvable:$true] %s284
          %287 = dma.hbm_to_vmem [thread:$0]  %s282, 128, %s285, %s274
        $region40: #{tpu_custom_call.1} parent=31 // pred_fallthru
          _
      $region32: #{tpu_custom_call.1} parent=5 // pred_fallthru
        _
      %p288 = scmp.le.s32.totalorder 1, %s23
      %p289 = scmp.lt.s32.totalorder %s23, 3
      %p290 = pnand %p288, %p289
      %p291 = pneg %p290
      // Predicated region
      $region41: #{tpu_custom_call.1} parent=5 // pred_check
        _
      $region42: #{tpu_custom_call.1} parent=5 // pred_check_branch
        %293 = sbr.rel (%p290) target = $region44
      $region43: #{tpu_custom_call.1} parent=5 // pred_region
        %s294 = ssub.s32 %s23, 1
        %s295 = sand.u32 %s36, 1
        %s296 = scalar_lea.sflag [#allocation3], %s295
        %s297 = sand.u32 %s36, 1
        %s298 = smul.addr %s297, 8
        %s299 = scalar_lea.vmem [#allocation2], %s298
        // Predicated region
        $region45: #{tpu_custom_call.1} parent=43 // pred_check
          %p300 = pneg %p49
        $region46: #{tpu_custom_call.1} parent=43 // pred_check_branch
          %302 = sbr.rel (%p300) target = $region48
        $region47: #{tpu_custom_call.1} parent=43 // pred_region
          %303 = dma.done %s296, 128
        $region48: #{tpu_custom_call.1} parent=43 // pred_fallthru
          _
        %s304 = sand.u32 %s28, 1
        %s305 = scalar_lea.sflag [#allocation6], %s304
        %s306 = sand.u32 %s62, 1
        %s307 = smul.addr %s306, 8
        %s308 = scalar_lea.vmem [#allocation5], %s307
        // Predicated region
        $region49: #{tpu_custom_call.1} parent=43 // pred_check
          %p309 = pneg %p75
        $region50: #{tpu_custom_call.1} parent=43 // pred_check_branch
          %311 = sbr.rel (%p309) target = $region52
        $region51: #{tpu_custom_call.1} parent=43 // pred_region
          %312 = dma.done %s305, 128
        $region52: #{tpu_custom_call.1} parent=43 // pred_fallthru
          _
        // Predicated region
        $region53: #{tpu_custom_call.1} parent=43 // pred_check
          %p313 = pneg %p96
        $region54: #{tpu_custom_call.1} parent=43 // pred_check_branch
          %315 = sbr.rel (%p313) target = $region56
        $region55: #{tpu_custom_call.1} parent=43 // pred_region
          %316 = dma.done [#allocation6], 2048
        $region56: #{tpu_custom_call.1} parent=43 // pred_fallthru
          _
        // Predicated region
        $region57: #{tpu_custom_call.1} parent=43 // pred_check
          %p317 = pneg %p117
        $region58: #{tpu_custom_call.1} parent=43 // pred_check_branch
          %319 = sbr.rel (%p317) target = $region60
        $region59: #{tpu_custom_call.1} parent=43 // pred_region
          %320 = dma.done [#allocation9], 16
        $region60: #{tpu_custom_call.1} parent=43 // pred_fallthru
          _
        // Predicated region
        $region61: #{tpu_custom_call.1} parent=43 // pred_check
          %p321 = pneg %p138
        $region62: #{tpu_custom_call.1} parent=43 // pred_check_branch
          %323 = sbr.rel (%p321) target = $region64
        $region63: #{tpu_custom_call.1} parent=43 // pred_region
          %324 = dma.done [#allocation9], 2048
        $region64: #{tpu_custom_call.1} parent=43 // pred_fallthru
          _
        // Predicated region
        $region65: #{tpu_custom_call.1} parent=43 // pred_check
          %p325 = pneg %p159
        $region66: #{tpu_custom_call.1} parent=43 // pred_check_branch
          %327 = sbr.rel (%p325) target = $region68
        $region67: #{tpu_custom_call.1} parent=43 // pred_region
          %328 = dma.done [#allocation12], 16
        $region68: #{tpu_custom_call.1} parent=43 // pred_fallthru
          _
        %s329 = sand.u32 %s36, 1
        %s330 = scalar_lea.sflag [#allocation3], %s329
        %s331 = sand.u32 %s36, 1
        %s332 = smul.addr %s331, 8
        %s333 = scalar_lea.vmem [#allocation2], %s332
        %p334 = pneg %p49
        %p335 = pneg %p46
        %s336 = sand.u32 %s28, 1
        %s337 = scalar_lea.sflag [#allocation6], %s336
        %s338 = sand.u32 %s62, 1
        %s339 = smul.addr %s338, 8
        %s340 = scalar_lea.vmem [#allocation5], %s339
        %p341 = pneg %p75
        %p342 = pneg %p72
        %p343 = pneg %p96
        %p344 = pneg %p93
        %p345 = pneg %p117
        %p346 = pneg %p114
        %p347 = pneg %p138
        %p348 = pneg %p135
        %p349 = pneg %p159
        %p350 = pneg %p156
        %p351 = pneg %p185
        %p352 = pneg %p182
        %s353 = sand.u32 %s172, 1
        %s354 = scalar_lea.sflag [#allocation4], %s353
        %s355 = sand.u32 %s172, 1
        %s356 = smul.addr %s355, 8
        %s357 = scalar_lea.vmem [#allocation13], %s356
        %v358 = vld [vmem:[%s308] sm:$0xff]
        %v359 = vld [vmem:[%s299] sm:$0xff]
        %v360 = vld [vmem:[#allocation7] sm:$0xff]
        %v361 = vld [vmem:[#allocation7 + $0x8] sm:$0xff]
        %v362 = vld [vmem:[#allocation7 + $0x10] sm:$0xff]
        %v363 = vld [vmem:[#allocation7 + $0x18] sm:$0xff]
        %v364 = vld [vmem:[#allocation7 + $0x20] sm:$0xff]
        %v365 = vld [vmem:[#allocation7 + $0x28] sm:$0xff]
        %v366 = vld [vmem:[#allocation7 + $0x30] sm:$0xff]
        %v367 = vld [vmem:[#allocation7 + $0x38] sm:$0xff]
        %v368 = vld [vmem:[#allocation7 + $0x40] sm:$0xff]
        %v369 = vld [vmem:[#allocation7 + $0x48] sm:$0xff]
        %v370 = vld [vmem:[#allocation7 + $0x50] sm:$0xff]
        %v371 = vld [vmem:[#allocation7 + $0x58] sm:$0xff]
        %v372 = vld [vmem:[#allocation7 + $0x60] sm:$0xff]
        %v373 = vld [vmem:[#allocation7 + $0x68] sm:$0xff]
        %v374 = vld [vmem:[#allocation7 + $0x70] sm:$0xff]
        %v375 = vld [vmem:[#allocation7 + $0x78] sm:$0xff]
        %376 = vmatprep.subr.mxu0 0.0
        %377 = vmatpush1.msra.mxu0 %v360
        %378 = vmatprep.subr.mxu0 0.0
        %379 = vmatpush1.msra.mxu0 %v361
        %380 = vmatprep.subr.mxu0 0.0
        %381 = vmatpush1.msra.mxu0 %v362
        %382 = vmatprep.subr.mxu0 0.0
        %383 = vmatpush1.msra.mxu0 %v363
        %384 = vmatprep.subr.mxu0 0.0
        %385 = vmatpush1.msra.mxu0 %v364
        %386 = vmatprep.subr.mxu0 0.0
        %387 = vmatpush1.msra.mxu0 %v365
        %388 = vmatprep.subr.mxu0 0.0
        %389 = vmatpush1.msra.mxu0 %v366
        %390 = vmatprep.subr.mxu0 0.0
        %391 = vmatpush1.msra.mxu0 %v367
        %392 = vmatprep.subr.mxu0 0.0
        %393 = vmatpush1.msra.mxu0 %v368
        %394 = vmatprep.subr.mxu0 0.0
        %395 = vmatpush1.msra.mxu0 %v369
        %396 = vmatprep.subr.mxu0 0.0
        %397 = vmatpush1.msra.mxu0 %v370
        %398 = vmatprep.subr.mxu0 0.0
        %399 = vmatpush1.msra.mxu0 %v371
        %400 = vmatprep.subr.mxu0 0.0
        %401 = vmatpush1.msra.mxu0 %v372
        %402 = vmatprep.subr.mxu0 0.0
        %403 = vmatpush1.msra.mxu0 %v373
        %404 = vmatprep.subr.mxu0 0.0
        %405 = vmatpush1.msra.mxu0 %v374
        %406 = vmatprep.subr.mxu0 0.0
        %407 = vmatpush1.msra.mxu0 %v375
        %408 = vmatprep.subr.mxu0 0.0
        %409 = vmatpush1.msra.mxu0 0.0
        %410 = vmatprep.subr.mxu0 0.0
        %411 = vmatpush1.msra.mxu0 0.0
        %412 = vmatprep.subr.mxu0 0.0
        %413 = vmatpush1.msra.mxu0 0.0
        %414 = vmatprep.subr.mxu0 0.0
        %415 = vmatpush1.msra.mxu0 0.0
        %416 = vmatprep.subr.mxu0 0.0
        %417 = vmatpush1.msra.mxu0 0.0
        %418 = vmatprep.subr.mxu0 0.0
        %419 = vmatpush1.msra.mxu0 0.0
        %420 = vmatprep.subr.mxu0 0.0
        %421 = vmatpush1.msra.mxu0 0.0
        %422 = vmatprep.subr.mxu0 0.0
        %423 = vmatpush1.msra.mxu0 0.0
        %424 = vmatprep.subr.mxu0 0.0
        %425 = vmatpush1.msra.mxu0 0.0
        %426 = vmatprep.subr.mxu0 0.0
        %427 = vmatpush1.msra.mxu0 0.0
        %428 = vmatprep.subr.mxu0 0.0
        %429 = vmatpush1.msra.mxu0 0.0
        %430 = vmatprep.subr.mxu0 0.0
        %431 = vmatpush1.msra.mxu0 0.0
        %432 = vmatprep.subr.mxu0 0.0
        %433 = vmatpush1.msra.mxu0 0.0
        %434 = vmatprep.subr.mxu0 0.0
        %435 = vmatpush1.msra.mxu0 0.0
        %436 = vmatprep.subr.mxu0 0.0
        %437 = vmatpush1.msra.mxu0 0.0
        %438 = vmatprep.subr.mxu0 0.0
        %439 = vmatpush1.msra.mxu0 0.0
        %440 = vmatprep.mubr.f32.mxu0 0.0
        %441 = vmatmul.mubr.f32.gmra.mrb[0].mxu0 %v359
        %v442 = vpop.f32.mrb[0].mxu0
        %v443 = vadd.f32 0.0, %v442
        %v444 = vpop.f32.mrb[0].mxu0
        %445 = vdwg.mxu0
        %447 = vset.pattern.permute.xlu0 0
        %448 = vperm.xlu0 %447, %v358
        %v449 = vpop.permute.xlu0 %448
        %v451 = vmul.f32 %v443, %v449
        %v452 = vld [vmem:[#allocation8] sm:$0x1]
        %v454 = vlaneseq
        %v455 = vshrl.u32 %v454, 7
        %v456 = vsub.s32 0, %v455
        %v457 = vrot.slane %v452, %v456
        %v459 = vadd.f32 %v451, %v457
        %v460 = vmul.f32 %v459, 0.01
        %v461 = vmax.f32 %v459, %v460
        %v462 = vld [vmem:[#allocation10] sm:$0xff]
        %v463 = vld [vmem:[#allocation10 + $0x8] sm:$0xff]
        %v464 = vld [vmem:[#allocation10 + $0x10] sm:$0xff]
        %v465 = vld [vmem:[#allocation10 + $0x18] sm:$0xff]
        %v466 = vld [vmem:[#allocation10 + $0x20] sm:$0xff]
        %v467 = vld [vmem:[#allocation10 + $0x28] sm:$0xff]
        %v468 = vld [vmem:[#allocation10 + $0x30] sm:$0xff]
        %v469 = vld [vmem:[#allocation10 + $0x38] sm:$0xff]
        %v470 = vld [vmem:[#allocation10 + $0x40] sm:$0xff]
        %v471 = vld [vmem:[#allocation10 + $0x48] sm:$0xff]
        %v472 = vld [vmem:[#allocation10 + $0x50] sm:$0xff]
        %v473 = vld [vmem:[#allocation10 + $0x58] sm:$0xff]
        %v474 = vld [vmem:[#allocation10 + $0x60] sm:$0xff]
        %v475 = vld [vmem:[#allocation10 + $0x68] sm:$0xff]
        %v476 = vld [vmem:[#allocation10 + $0x70] sm:$0xff]
        %v477 = vld [vmem:[#allocation10 + $0x78] sm:$0xff]
        %478 = vmatprep.subr.mxu0 0.0
        %479 = vmatpush1.msra.mxu0 %v462
        %480 = vmatprep.subr.mxu0 0.0
        %481 = vmatpush1.msra.mxu0 %v463
        %482 = vmatprep.subr.mxu0 0.0
        %483 = vmatpush1.msra.mxu0 %v464
        %484 = vmatprep.subr.mxu0 0.0
        %485 = vmatpush1.msra.mxu0 %v465
        %486 = vmatprep.subr.mxu0 0.0
        %487 = vmatpush1.msra.mxu0 %v466
        %488 = vmatprep.subr.mxu0 0.0
        %489 = vmatpush1.msra.mxu0 %v467
        %490 = vmatprep.subr.mxu0 0.0
        %491 = vmatpush1.msra.mxu0 %v468
        %492 = vmatprep.subr.mxu0 0.0
        %493 = vmatpush1.msra.mxu0 %v469
        %494 = vmatprep.subr.mxu0 0.0
        %495 = vmatpush1.msra.mxu0 %v470
        %496 = vmatprep.subr.mxu0 0.0
        %497 = vmatpush1.msra.mxu0 %v471
        %498 = vmatprep.subr.mxu0 0.0
        %499 = vmatpush1.msra.mxu0 %v472
        %500 = vmatprep.subr.mxu0 0.0
        %501 = vmatpush1.msra.mxu0 %v473
        %502 = vmatprep.subr.mxu0 0.0
        %503 = vmatpush1.msra.mxu0 %v474
        %504 = vmatprep.subr.mxu0 0.0
        %505 = vmatpush1.msra.mxu0 %v475
        %506 = vmatprep.subr.mxu0 0.0
        %507 = vmatpush1.msra.mxu0 %v476
        %508 = vmatprep.subr.mxu0 0.0
        %509 = vmatpush1.msra.mxu0 %v477
        %510 = vmatprep.subr.mxu0 0.0
        %511 = vmatpush1.msra.mxu0 0.0
        %512 = vmatprep.subr.mxu0 0.0
        %513 = vmatpush1.msra.mxu0 0.0
        %514 = vmatprep.subr.mxu0 0.0
        %515 = vmatpush1.msra.mxu0 0.0
        %516 = vmatprep.subr.mxu0 0.0
        %517 = vmatpush1.msra.mxu0 0.0
        %518 = vmatprep.subr.mxu0 0.0
        %519 = vmatpush1.msra.mxu0 0.0
        %520 = vmatprep.subr.mxu0 0.0
        %521 = vmatpush1.msra.mxu0 0.0
        %522 = vmatprep.subr.mxu0 0.0
        %523 = vmatpush1.msra.mxu0 0.0
        %524 = vmatprep.subr.mxu0 0.0
        %525 = vmatpush1.msra.mxu0 0.0
        %526 = vmatprep.subr.mxu0 0.0
        %527 = vmatpush1.msra.mxu0 0.0
        %528 = vmatprep.subr.mxu0 0.0
        %529 = vmatpush1.msra.mxu0 0.0
        %530 = vmatprep.subr.mxu0 0.0
        %531 = vmatpush1.msra.mxu0 0.0
        %532 = vmatprep.subr.mxu0 0.0
        %533 = vmatpush1.msra.mxu0 0.0
        %534 = vmatprep.subr.mxu0 0.0
        %535 = vmatpush1.msra.mxu0 0.0
        %536 = vmatprep.subr.mxu0 0.0
        %537 = vmatpush1.msra.mxu0 0.0
        %538 = vmatprep.subr.mxu0 0.0
        %539 = vmatpush1.msra.mxu0 0.0
        %540 = vmatprep.subr.mxu0 0.0
        %541 = vmatpush1.msra.mxu0 0.0
        %542 = vmatprep.mubr.f32.mxu0 0.0
        %543 = vmatmul.mubr.f32.gmra.mrb[0].mxu0 %v461
        %v544 = vpop.f32.mrb[0].mxu0
        %v545 = vadd.f32 0.0, %v544
        %v546 = vpop.f32.mrb[0].mxu0
        %547 = vdwg.mxu0
        %v548 = vmul.f32 %v545, %v449
        %v549 = vld [vmem:[#allocation11] sm:$0x1]
        %v551 = vlaneseq
        %v552 = vshrl.u32 %v551, 7
        %v553 = vsub.s32 0, %v552
        %v554 = vrot.slane %v549, %v553
        %v556 = vadd.f32 %v548, %v554
        %v557 = vmul.f32 %v556, 0.01
        %v558 = vmax.f32 %v556, %v557
        %v559 = vmul.f32 %v558, %v449
        %560 = vst [vmem:[%s357] sm:$0xff] %v559
        %s561 = sand.u32 %s172, 1
        %s562 = scalar_lea.sflag [#allocation4], %s561
        %s563 = sand.u32 %s172, 1
        %s564 = smul.addr %s563, 8
        %s565 = scalar_lea.vmem [#allocation13], %s564
        // Predicated region
        $region69: #{tpu_custom_call.1} parent=43 // pred_check
          %p566 = pneg %p182
        $region70: #{tpu_custom_call.1} parent=43 // pred_check_branch
          %568 = sbr.rel (%p566) target = $region72
        $region71: #{tpu_custom_call.1} parent=43 // pred_region
          %s570 = ssub.s32 128, 128
          %571 = vsyncadd %s562, %s570
          %s572 = smul.addr %s28, 128
          %s573 = scalar_lea.hbm %s6, %s572
          %s575 = sshll.u32 %s565, 4
          %s576 = int_to_ptr.vmem [resolvable:$true] %s575
          %578 = dma.vmem_to_hbm [thread:$0]  %s576, 128, %s573, %s562
        $region72: #{tpu_custom_call.1} parent=43 // pred_fallthru
          _
      $region44: #{tpu_custom_call.1} parent=5 // pred_fallthru
        _
      %p579 = scmp.le.s32.totalorder 2, %s23
      // Predicated region
      $region73: #{tpu_custom_call.1} parent=5 // pred_check
        %p580 = pneg %p579
      $region74: #{tpu_custom_call.1} parent=5 // pred_check_branch
        %582 = sbr.rel (%p580) target = $region76
      $region75: #{tpu_custom_call.1} parent=5 // pred_region
        %s583 = ssub.s32 %s23, 2
        // Predicated region
        $region77: #{tpu_custom_call.1} parent=75 // pred_check
          %p584 = pneg %p188
        $region78: #{tpu_custom_call.1} parent=75 // pred_check_branch
          %586 = sbr.rel (%p584) target = $region80
        $region79: #{tpu_custom_call.1} parent=75 // pred_region
          %s587 = sand.u32 %s173, 1
          %s588 = scalar_lea.sflag [#allocation4], %s587
          %s589 = sand.u32 %s173, 1
          %s590 = smul.addr %s589, 8
          %s591 = scalar_lea.vmem [#allocation13], %s590
          %592 = dma.done %s588, 128
        $region80: #{tpu_custom_call.1} parent=75 // pred_fallthru
          _
      $region76: #{tpu_custom_call.1} parent=5 // pred_fallthru
        _
    $region6: #{tpu_custom_call.1} parent=1 // loop_footer
      %s27 = sadd.s32 1, %s23
    $region7: #{tpu_custom_call.1} parent=1 // loop_footer_branch
      %22 = sbr.rel target = $region3
    $region8: #{tpu_custom_call.1} parent=1 // loop_exit
      _
    %593 = vsyncpa [#allocation3], 1
    %s594 = scalar_lea.sflag [#allocation3], 1
    %595 = vsyncpa %s594, 1
    %596 = vsyncpa [#allocation6], 1
    %s597 = scalar_lea.sflag [#allocation6], 1
    %598 = vsyncpa %s597, 1
    %599 = vsyncpa [#allocation9], 1
    %600 = vsyncpa [#allocation12], 1
    %601 = vsyncpa [#allocation4], 1
    %s602 = scalar_lea.sflag [#allocation4], 1
    %603 = vsyncpa %s602, 1

// kernel: tpu_custom_call.1
$region0: #{tpu_custom_call.1}
  #allocation0 [shape = 'u32[]', space=smem, size = 0x4, offset = 0x4, fixed_abs, tag = 'smem constant byte address 0x4 - core index']
  #allocation1 [shape = 'u32[144,128]{1,0:T(1,128)}', space=vmem, size = 0x12000, scoped, tag = 'internal scratch']
  %s0 = inlined_call_operand.hbm [shape: f32[16,128], index: 0, kind: input, shape index: {}]
  %s1 = inlined_call_operand.hbm [shape: f32[16,1], index: 1, kind: input, shape index: {}]
  %s2 = inlined_call_operand.hbm [shape: f32[128,128], index: 2, kind: input, shape index: {}]
  %s3 = inlined_call_operand.hbm [shape: f32[1,128], index: 3, kind: input, shape index: {}]
  %s4 = inlined_call_operand.hbm [shape: f32[128,128], index: 4, kind: input, shape index: {}]
  %s5 = inlined_call_operand.hbm [shape: f32[1,128], index: 5, kind: input, shape index: {}]
  %s6 = inlined_call_operand.hbm [shape: f32[16,128], index: 6, kind: output, shape index: {}]
  %s7 = sld [smem:[#allocation0]]
  $region81: #{tpu_custom_call.1} parent=0
    _
  %s9 = ssub.s32 1, %s7
  %s10 = scalar_select 0, %s9, %s7
  $region1: #{tpu_custom_call.1} parent=0
    #allocation2 [shape = 'u8[8192]{0}', space=vmem, size = 0x2000, scoped, tag = 'input window, operand 0']
    #allocation3 [shape = 's32[2]{0}', space=sflag, size = 0x8, scoped, tag = 'scoped memory for tpu_custom_call.1']
    #allocation4 [shape = 's32[2]{0}', space=sflag, size = 0x8, scoped, tag = 'scoped memory for tpu_custom_call.1']
    #allocation5 [shape = 'u8[8192]{0}', space=vmem, size = 0x2000, scoped, tag = 'input window, operand 1']
    #allocation6 [shape = 's32[2]{0}', space=sflag, size = 0x8, scoped, tag = 'scoped memory for tpu_custom_call.1']
    #allocation7 [shape = 'u8[65536]{0}', space=vmem, size = 0x10000, scoped, tag = 'input window, operand 2, single buffered']
    #allocation8 [shape = 'u8[512]{0}', space=vmem, size = 0x400, scoped, tag = 'input window, operand 3, single buffered']
    #allocation9 [shape = 's32[1]{0}', space=sflag, size = 0x4, scoped, tag = 'scoped memory for tpu_custom_call.1']
    #allocation10 [shape = 'u8[65536]{0}', space=vmem, size = 0x10000, scoped, tag = 'input window, operand 4, single buffered']
    #allocation11 [shape = 'u8[512]{0}', space=vmem, size = 0x400, scoped, tag = 'input window, operand 5, single buffered']
    #allocation12 [shape = 's32[1]{0}', space=sflag, size = 0x4, scoped, tag = 'scoped memory for tpu_custom_call.1']
    #allocation13 [shape = 'u8[8192]{0}', space=vmem, size = 0x2000, scoped, tag = 'output window, operand 0']
    %11 = vsyncpa [#allocation3], 0
    %s12 = scalar_lea.sflag [#allocation3], 1
    %13 = vsyncpa %s12, 0
    %14 = vsyncpa [#allocation6], 0
    %s15 = scalar_lea.sflag [#allocation6], 1
    %16 = vsyncpa %s15, 0
    %17 = vsyncpa [#allocation9], 0
    %18 = vsyncpa [#allocation12], 0
    %19 = vsyncpa [#allocation4], 0
    %s20 = scalar_lea.sflag [#allocation4], 1
    %21 = vsyncpa %s20, 0
    loop: start=0, step=1, limit=4
    $region2: #{tpu_custom_call.1} parent=1 // loop_pre_header
      _
    $region3: #{tpu_custom_call.1} parent=1 // loop_header
      %s23 = sphi 0, %s27
      %p24 = scmp.ge.s32.totalorder %s23, 4
      %s33 = sphi 0, %s35
      %s36 = sphi 0, %s33
      %s37 = sphi 0, %s36
      %s53 = sphi 0, %s37
      %s59 = sphi 0, %s61
      %s62 = sphi 0, %s59
      %s63 = sphi 0, %s62
      %s79 = sphi 0, %s63
      %s83 = sphi 0, %s83
      %s85 = sphi 0, %s83
      %s86 = sphi 0, %s85
      %s100 = sphi 0, %s86
      %s104 = sphi 0, %s104
      %s106 = sphi 0, %s104
      %s107 = sphi 0, %s106
      %s121 = sphi 0, %s107
      %s125 = sphi 0, %s125
      %s127 = sphi 0, %s125
      %s128 = sphi 0, %s127
      %s142 = sphi 0, %s128
      %s146 = sphi 0, %s146
      %s148 = sphi 0, %s146
      %s149 = sphi 0, %s148
      %s163 = sphi 0, %s149
      %s169 = sphi 0, %s171
      %s172 = sphi 0, %s169
      %s173 = sphi 0, %s172
      %s189 = sphi 0, %s173
    $region4: #{tpu_custom_call.1} parent=1 // loop_header_branch
      %26 = sbr.rel (%p24) target = $region8
    $region5: #{tpu_custom_call.1} parent=1 // loop_body
      %s28 = ssub.s32 %s23, 1
      %s29 = ssub.s32 %s23, 2
      %s30 = sadd.s32 %s23, 1
      %s31 = ssub.s32 %s23, %s30
      %p32 = scmp.eq.s32.totalorder %s31, 0
      %s34 = sadd.s32 %s33, 1
      %s35 = scalar_select %p32, %s33, %s34
      %p38 = pneg %p32
      %p39 = scmp.eq.s32.totalorder %s23, 1
      %p40 = por %p38, %p39
      %p41 = scmp.ne.s32.totalorder %s33, %s36
      %p42 = scmp.eq.s32.totalorder %s23, 0
      %p43 = por %p41, %p42
      %p44 = scmp.ne.s32.totalorder %s33, %s36
      %p45 = scmp.eq.s32.totalorder %s28, 1
      %p46 = por %p44, %p45
      %p47 = scmp.ne.s32.totalorder %s36, %s37
      %p48 = scmp.eq.s32.totalorder %s28, 0
      %p49 = por %p47, %p48
      %p50 = scmp.ne.s32.totalorder %s36, %s37
      %p51 = scmp.eq.s32.totalorder %s29, 1
      %p52 = por %p50, %p51
      %p54 = scmp.ne.s32.totalorder %s37, %s53
      %p55 = scmp.eq.s32.totalorder %s29, 0
      %p56 = por %p54, %p55
      %s57 = ssub.s32 %s23, %s30
      %p58 = scmp.eq.s32.totalorder %s57, 0
      %s60 = sadd.s32 %s59, 1
      %s61 = scalar_select %p58, %s59, %s60
      %p64 = pneg %p58
      %p65 = scmp.eq.s32.totalorder %s23, 1
      %p66 = por %p64, %p65
      %p67 = scmp.ne.s32.totalorder %s59, %s62
      %p68 = scmp.eq.s32.totalorder %s23, 0
      %p69 = por %p67, %p68
      %p70 = scmp.ne.s32.totalorder %s59, %s62
      %p71 = scmp.eq.s32.totalorder %s28, 1
      %p72 = por %p70, %p71
      %p73 = scmp.ne.s32.totalorder %s62, %s63
      %p74 = scmp.eq.s32.totalorder %s28, 0
      %p75 = por %p73, %p74
      %p76 = scmp.ne.s32.totalorder %s62, %s63
      %p77 = scmp.eq.s32.totalorder %s29, 1
      %p78 = por %p76, %p77
      %p80 = scmp.ne.s32.totalorder %s63, %s79
      %p81 = scmp.eq.s32.totalorder %s29, 0
      %p82 = por %p80, %p81
      %s84 = sadd.s32 %s83, 1
      %p87 = scmp.eq.s32.totalorder %s23, 1
      %p88 = scmp.ne.s32.totalorder %s83, %s85
      %p89 = scmp.eq.s32.totalorder %s23, 0
      %p90 = por %p88, %p89
      %p91 = scmp.ne.s32.totalorder %s83, %s85
      %p92 = scmp.eq.s32.totalorder %s28, 1
      %p93 = por %p91, %p92
      %p94 = scmp.ne.s32.totalorder %s85, %s86
      %p95 = scmp.eq.s32.totalorder %s28, 0
      %p96 = por %p94, %p95
      %p97 = scmp.ne.s32.totalorder %s85, %s86
      %p98 = scmp.eq.s32.totalorder %s29, 1
      %p99 = por %p97, %p98
      %p101 = scmp.ne.s32.totalorder %s86, %s100
      %p102 = scmp.eq.s32.totalorder %s29, 0
      %p103 = por %p101, %p102
      %s105 = sadd.s32 %s104, 1
      %p108 = scmp.eq.s32.totalorder %s23, 1
      %p109 = scmp.ne.s32.totalorder %s104, %s106
      %p110 = scmp.eq.s32.totalorder %s23, 0
      %p111 = por %p109, %p110
      %p112 = scmp.ne.s32.totalorder %s104, %s106
      %p113 = scmp.eq.s32.totalorder %s28, 1
      %p114 = por %p112, %p113
      %p115 = scmp.ne.s32.totalorder %s106, %s107
      %p116 = scmp.eq.s32.totalorder %s28, 0
      %p117 = por %p115, %p116
      %p118 = scmp.ne.s32.totalorder %s106, %s107
      %p119 = scmp.eq.s32.totalorder %s29, 1
      %p120 = por %p118, %p119
      %p122 = scmp.ne.s32.totalorder %s107, %s121
      %p123 = scmp.eq.s32.totalorder %s29, 0
      %p124 = por %p122, %p123
      %s126 = sadd.s32 %s125, 1
      %p129 = scmp.eq.s32.totalorder %s23, 1
      %p130 = scmp.ne.s32.totalorder %s125, %s127
      %p131 = scmp.eq.s32.totalorder %s23, 0
      %p132 = por %p130, %p131
      %p133 = scmp.ne.s32.totalorder %s125, %s127
      %p134 = scmp.eq.s32.totalorder %s28, 1
      %p135 = por %p133, %p134
      %p136 = scmp.ne.s32.totalorder %s127, %s128
      %p137 = scmp.eq.s32.totalorder %s28, 0
      %p138 = por %p136, %p137
      %p139 = scmp.ne.s32.totalorder %s127, %s128
      %p140 = scmp.eq.s32.totalorder %s29, 1
      %p141 = por %p139, %p140
      %p143 = scmp.ne.s32.totalorder %s128, %s142
      %p144 = scmp.eq.s32.totalorder %s29, 0
      %p145 = por %p143, %p144
      %s147 = sadd.s32 %s146, 1
      %p150 = scmp.eq.s32.totalorder %s23, 1
      %p151 = scmp.ne.s32.totalorder %s146, %s148
      %p152 = scmp.eq.s32.totalorder %s23, 0
      %p153 = por %p151, %p152
      %p154 = scmp.ne.s32.totalorder %s146, %s148
      %p155 = scmp.eq.s32.totalorder %s28, 1
      %p156 = por %p154, %p155
      %p157 = scmp.ne.s32.totalorder %s148, %s149
      %p158 = scmp.eq.s32.totalorder %s28, 0
      %p159 = por %p157, %p158
      %p160 = scmp.ne.s32.totalorder %s148, %s149
      %p161 = scmp.eq.s32.totalorder %s29, 1
      %p162 = por %p160, %p161
      %p164 = scmp.ne.s32.totalorder %s149, %s163
      %p165 = scmp.eq.s32.totalorder %s29, 0
      %p166 = por %p164, %p165
      %s167 = ssub.s32 %s23, %s30
      %p168 = scmp.eq.s32.totalorder %s167, 0
      %s170 = sadd.s32 %s169, 1
      %s171 = scalar_select %p168, %s169, %s170
      %p174 = pneg %p168
      %p175 = scmp.eq.s32.totalorder %s23, 1
      %p176 = por %p174, %p175
      %p177 = scmp.ne.s32.totalorder %s169, %s172
      %p178 = scmp.eq.s32.totalorder %s23, 0
      %p179 = por %p177, %p178
      %p180 = scmp.ne.s32.totalorder %s169, %s172
      %p181 = scmp.eq.s32.totalorder %s28, 1
      %p182 = por %p180, %p181
      %p183 = scmp.ne.s32.totalorder %s172, %s173
      %p184 = scmp.eq.s32.totalorder %s28, 0
      %p185 = por %p183, %p184
      %p186 = scmp.ne.s32.totalorder %s172, %s173
      %p187 = scmp.eq.s32.totalorder %s29, 1
      %p188 = por %p186, %p187
      %p190 = scmp.ne.s32.totalorder %s173, %s189
      %p191 = scmp.eq.s32.totalorder %s29, 0
      %p192 = por %p190, %p191
      %p193 = scmp.le.s32.totalorder 1, %s23
      %p194 = scmp.lt.s32.totalorder %s23, 3
      %p195 = pnand %p193, %p194
      %p196 = pneg %p195
      // Predicated region
      $region9: #{tpu_custom_call.1} parent=5 // pred_check
        _
      $region10: #{tpu_custom_call.1} parent=5 // pred_check_branch
        %198 = sbr.rel (%p195) target = $region12
      $region11: #{tpu_custom_call.1} parent=5 // pred_region
        %s199 = ssub.s32 %s23, 1
        // Predicated region
        $region13: #{tpu_custom_call.1} parent=11 // pred_check
          %p200 = pneg %p96
        $region14: #{tpu_custom_call.1} parent=11 // pred_check_branch
          %202 = sbr.rel (%p200) target = $region16
        $region15: #{tpu_custom_call.1} parent=11 // pred_region
          %s204 = ssub.s32 2048, 2048
          %205 = vsyncadd [#allocation6], %s204
          %s206 = sshll.u32 [#allocation7], 4
          %s207 = int_to_ptr.vmem [resolvable:$true] %s206
          %212 = dma.hbm_to_vmem [thread:$0]  %s2, 2048, %s207, [#allocation6], 128, 128, 8
        $region16: #{tpu_custom_call.1} parent=11 // pred_fallthru
          _
        // Predicated region
        $region17: #{tpu_custom_call.1} parent=11 // pred_check
          %p213 = pneg %p117
        $region18: #{tpu_custom_call.1} parent=11 // pred_check_branch
          %215 = sbr.rel (%p213) target = $region20
        $region19: #{tpu_custom_call.1} parent=11 // pred_region
          %s217 = ssub.s32 16, 16
          %218 = vsyncadd [#allocation9], %s217
          %s220 = sshll.u32 [#allocation8], 4
          %s221 = int_to_ptr.vmem [resolvable:$true] %s220
          %223 = dma.hbm_to_vmem [thread:$0]  %s3, 16, %s221, [#allocation9]
        $region20: #{tpu_custom_call.1} parent=11 // pred_fallthru
          _
        // Predicated region
        $region21: #{tpu_custom_call.1} parent=11 // pred_check
          %p224 = pneg %p138
        $region22: #{tpu_custom_call.1} parent=11 // pred_check_branch
          %226 = sbr.rel (%p224) target = $region24
        $region23: #{tpu_custom_call.1} parent=11 // pred_region
          %s228 = ssub.s32 2048, 2048
          %229 = vsyncadd [#allocation9], %s228
          %s230 = sshll.u32 [#allocation10], 4
          %s231 = int_to_ptr.vmem [resolvable:$true] %s230
          %236 = dma.hbm_to_vmem [thread:$0]  %s4, 2048, %s231, [#allocation9], 128, 128, 8
        $region24: #{tpu_custom_call.1} parent=11 // pred_fallthru
          _
        // Predicated region
        $region25: #{tpu_custom_call.1} parent=11 // pred_check
          %p237 = pneg %p159
        $region26: #{tpu_custom_call.1} parent=11 // pred_check_branch
          %239 = sbr.rel (%p237) target = $region28
        $region27: #{tpu_custom_call.1} parent=11 // pred_region
          %s241 = ssub.s32 16, 16
          %242 = vsyncadd [#allocation12], %s241
          %s244 = sshll.u32 [#allocation11], 4
          %s245 = int_to_ptr.vmem [resolvable:$true] %s244
          %247 = dma.hbm_to_vmem [thread:$0]  %s5, 16, %s245, [#allocation12]
        $region28: #{tpu_custom_call.1} parent=11 // pred_fallthru
          _
      $region12: #{tpu_custom_call.1} parent=5 // pred_fallthru
        _
      %p248 = scmp.lt.s32.totalorder %s23, 2
      // Predicated region
      $region29: #{tpu_custom_call.1} parent=5 // pred_check
        %p249 = pneg %p248
      $region30: #{tpu_custom_call.1} parent=5 // pred_check_branch
        %251 = sbr.rel (%p249) target = $region32
      $region31: #{tpu_custom_call.1} parent=5 // pred_region
        // Predicated region
        $region33: #{tpu_custom_call.1} parent=31 // pred_check
          %p252 = pneg %p43
        $region34: #{tpu_custom_call.1} parent=31 // pred_check_branch
          %254 = sbr.rel (%p252) target = $region36
        $region35: #{tpu_custom_call.1} parent=31 // pred_region
          %s255 = sand.u32 %s33, 1
          %s256 = scalar_lea.sflag [#allocation3], %s255
          %s257 = sand.u32 %s33, 1
          %s258 = smul.addr %s257, 8
          %s259 = scalar_lea.vmem [#allocation2], %s258
          %s261 = ssub.s32 128, 128
          %262 = vsyncadd %s256, %s261
          %s263 = smul.addr %s23, 128
          %s264 = scalar_lea.hbm %s0, %s263
          %s266 = sshll.u32 %s259, 4
          %s267 = int_to_ptr.vmem [resolvable:$true] %s266
          %269 = dma.hbm_to_vmem [thread:$0]  %s264, 128, %s267, %s256
        $region36: #{tpu_custom_call.1} parent=31 // pred_fallthru
          _
        // Predicated region
        $region37: #{tpu_custom_call.1} parent=31 // pred_check
          %p270 = pneg %p69
        $region38: #{tpu_custom_call.1} parent=31 // pred_check_branch
          %272 = sbr.rel (%p270) target = $region40
        $region39: #{tpu_custom_call.1} parent=31 // pred_region
          %s273 = sand.u32 %s23, 1
          %s274 = scalar_lea.sflag [#allocation6], %s273
          %s275 = sand.u32 %s59, 1
          %s276 = smul.addr %s275, 8
          %s277 = scalar_lea.vmem [#allocation5], %s276
          %s279 = ssub.s32 128, 128
          %280 = vsyncadd %s274, %s279
          %s281 = smul.addr %s23, 128
          %s282 = scalar_lea.hbm %s1, %s281
          %s284 = sshll.u32 %s277, 4
          %s285 = int_to_ptr.vmem [resolvable:$true] %s284
          %287 = dma.hbm_to_vmem [thread:$0]  %s282, 128, %s285, %s274
        $region40: #{tpu_custom_call.1} parent=31 // pred_fallthru
          _
      $region32: #{tpu_custom_call.1} parent=5 // pred_fallthru
        _
      %p288 = scmp.le.s32.totalorder 1, %s23
      %p289 = scmp.lt.s32.totalorder %s23, 3
      %p290 = pnand %p288, %p289
      %p291 = pneg %p290
      // Predicated region
      $region41: #{tpu_custom_call.1} parent=5 // pred_check
        _
      $region42: #{tpu_custom_call.1} parent=5 // pred_check_branch
        %293 = sbr.rel (%p290) target = $region44
      $region43: #{tpu_custom_call.1} parent=5 // pred_region
        %s294 = ssub.s32 %s23, 1
        %s295 = sand.u32 %s36, 1
        %s296 = scalar_lea.sflag [#allocation3], %s295
        %s297 = sand.u32 %s36, 1
        %s298 = smul.addr %s297, 8
        %s299 = scalar_lea.vmem [#allocation2], %s298
        // Predicated region
        $region45: #{tpu_custom_call.1} parent=43 // pred_check
          %p300 = pneg %p49
        $region46: #{tpu_custom_call.1} parent=43 // pred_check_branch
          %302 = sbr.rel (%p300) target = $region48
        $region47: #{tpu_custom_call.1} parent=43 // pred_region
          %303 = dma.done %s296, 128
        $region48: #{tpu_custom_call.1} parent=43 // pred_fallthru
          _
        %s304 = sand.u32 %s28, 1
        %s305 = scalar_lea.sflag [#allocation6], %s304
        %s306 = sand.u32 %s62, 1
        %s307 = smul.addr %s306, 8
        %s308 = scalar_lea.vmem [#allocation5], %s307
        // Predicated region
        $region49: #{tpu_custom_call.1} parent=43 // pred_check
          %p309 = pneg %p75
        $region50: #{tpu_custom_call.1} parent=43 // pred_check_branch
          %311 = sbr.rel (%p309) target = $region52
        $region51: #{tpu_custom_call.1} parent=43 // pred_region
          %312 = dma.done %s305, 128
        $region52: #{tpu_custom_call.1} parent=43 // pred_fallthru
          _
        // Predicated region
        $region53: #{tpu_custom_call.1} parent=43 // pred_check
          %p313 = pneg %p96
        $region54: #{tpu_custom_call.1} parent=43 // pred_check_branch
          %315 = sbr.rel (%p313) target = $region56
        $region55: #{tpu_custom_call.1} parent=43 // pred_region
          %316 = dma.done [#allocation6], 2048
        $region56: #{tpu_custom_call.1} parent=43 // pred_fallthru
          _
        // Predicated region
        $region57: #{tpu_custom_call.1} parent=43 // pred_check
          %p317 = pneg %p117
        $region58: #{tpu_custom_call.1} parent=43 // pred_check_branch
          %319 = sbr.rel (%p317) target = $region60
        $region59: #{tpu_custom_call.1} parent=43 // pred_region
          %320 = dma.done [#allocation9], 16
        $region60: #{tpu_custom_call.1} parent=43 // pred_fallthru
          _
        // Predicated region
        $region61: #{tpu_custom_call.1} parent=43 // pred_check
          %p321 = pneg %p138
        $region62: #{tpu_custom_call.1} parent=43 // pred_check_branch
          %323 = sbr.rel (%p321) target = $region64
        $region63: #{tpu_custom_call.1} parent=43 // pred_region
          %324 = dma.done [#allocation9], 2048
        $region64: #{tpu_custom_call.1} parent=43 // pred_fallthru
          _
        // Predicated region
        $region65: #{tpu_custom_call.1} parent=43 // pred_check
          %p325 = pneg %p159
        $region66: #{tpu_custom_call.1} parent=43 // pred_check_branch
          %327 = sbr.rel (%p325) target = $region68
        $region67: #{tpu_custom_call.1} parent=43 // pred_region
          %328 = dma.done [#allocation12], 16
        $region68: #{tpu_custom_call.1} parent=43 // pred_fallthru
          _
        %s329 = sand.u32 %s36, 1
        %s330 = scalar_lea.sflag [#allocation3], %s329
        %s331 = sand.u32 %s36, 1
        %s332 = smul.addr %s331, 8
        %s333 = scalar_lea.vmem [#allocation2], %s332
        %p334 = pneg %p49
        %p335 = pneg %p46
        %s336 = sand.u32 %s28, 1
        %s337 = scalar_lea.sflag [#allocation6], %s336
        %s338 = sand.u32 %s62, 1
        %s339 = smul.addr %s338, 8
        %s340 = scalar_lea.vmem [#allocation5], %s339
        %p341 = pneg %p75
        %p342 = pneg %p72
        %p343 = pneg %p96
        %p344 = pneg %p93
        %p345 = pneg %p117
        %p346 = pneg %p114
        %p347 = pneg %p138
        %p348 = pneg %p135
        %p349 = pneg %p159
        %p350 = pneg %p156
        %p351 = pneg %p185
        %p352 = pneg %p182
        %s353 = sand.u32 %s172, 1
        %s354 = scalar_lea.sflag [#allocation4], %s353
        %s355 = sand.u32 %s172, 1
        %s356 = smul.addr %s355, 8
        %s357 = scalar_lea.vmem [#allocation13], %s356
        %v358 = vld [vmem:[%s308] sm:$0xff]
        %v359 = vld [vmem:[%s299] sm:$0xff]
        %v360 = vld [vmem:[#allocation7] sm:$0xff]
        %v361 = vld [vmem:[#allocation7 + $0x8] sm:$0xff]
        %v362 = vld [vmem:[#allocation7 + $0x10] sm:$0xff]
        %v363 = vld [vmem:[#allocation7 + $0x18] sm:$0xff]
        %v364 = vld [vmem:[#allocation7 + $0x20] sm:$0xff]
        %v365 = vld [vmem:[#allocation7 + $0x28] sm:$0xff]
        %v366 = vld [vmem:[#allocation7 + $0x30] sm:$0xff]
        %v367 = vld [vmem:[#allocation7 + $0x38] sm:$0xff]
        %v368 = vld [vmem:[#allocation7 + $0x40] sm:$0xff]
        %v369 = vld [vmem:[#allocation7 + $0x48] sm:$0xff]
        %v370 = vld [vmem:[#allocation7 + $0x50] sm:$0xff]
        %v371 = vld [vmem:[#allocation7 + $0x58] sm:$0xff]
        %v372 = vld [vmem:[#allocation7 + $0x60] sm:$0xff]
        %v373 = vld [vmem:[#allocation7 + $0x68] sm:$0xff]
        %v374 = vld [vmem:[#allocation7 + $0x70] sm:$0xff]
        %v375 = vld [vmem:[#allocation7 + $0x78] sm:$0xff]
        %376 = vmatprep.subr.mxu0 0.0
        %377 = vmatpush1.msra.mxu0 %v360
        %378 = vmatprep.subr.mxu0 0.0
        %379 = vmatpush1.msra.mxu0 %v361
        %380 = vmatprep.subr.mxu0 0.0
        %381 = vmatpush1.msra.mxu0 %v362
        %382 = vmatprep.subr.mxu0 0.0
        %383 = vmatpush1.msra.mxu0 %v363
        %384 = vmatprep.subr.mxu0 0.0
        %385 = vmatpush1.msra.mxu0 %v364
        %386 = vmatprep.subr.mxu0 0.0
        %387 = vmatpush1.msra.mxu0 %v365
        %388 = vmatprep.subr.mxu0 0.0
        %389 = vmatpush1.msra.mxu0 %v366
        %390 = vmatprep.subr.mxu0 0.0
        %391 = vmatpush1.msra.mxu0 %v367
        %392 = vmatprep.subr.mxu0 0.0
        %393 = vmatpush1.msra.mxu0 %v368
        %394 = vmatprep.subr.mxu0 0.0
        %395 = vmatpush1.msra.mxu0 %v369
        %396 = vmatprep.subr.mxu0 0.0
        %397 = vmatpush1.msra.mxu0 %v370
        %398 = vmatprep.subr.mxu0 0.0
        %399 = vmatpush1.msra.mxu0 %v371
        %400 = vmatprep.subr.mxu0 0.0
        %401 = vmatpush1.msra.mxu0 %v372
        %402 = vmatprep.subr.mxu0 0.0
        %403 = vmatpush1.msra.mxu0 %v373
        %404 = vmatprep.subr.mxu0 0.0
        %405 = vmatpush1.msra.mxu0 %v374
        %406 = vmatprep.subr.mxu0 0.0
        %407 = vmatpush1.msra.mxu0 %v375
        %408 = vmatprep.subr.mxu0 0.0
        %409 = vmatpush1.msra.mxu0 0.0
        %410 = vmatprep.subr.mxu0 0.0
        %411 = vmatpush1.msra.mxu0 0.0
        %412 = vmatprep.subr.mxu0 0.0
        %413 = vmatpush1.msra.mxu0 0.0
        %414 = vmatprep.subr.mxu0 0.0
        %415 = vmatpush1.msra.mxu0 0.0
        %416 = vmatprep.subr.mxu0 0.0
        %417 = vmatpush1.msra.mxu0 0.0
        %418 = vmatprep.subr.mxu0 0.0
        %419 = vmatpush1.msra.mxu0 0.0
        %420 = vmatprep.subr.mxu0 0.0
        %421 = vmatpush1.msra.mxu0 0.0
        %422 = vmatprep.subr.mxu0 0.0
        %423 = vmatpush1.msra.mxu0 0.0
        %424 = vmatprep.subr.mxu0 0.0
        %425 = vmatpush1.msra.mxu0 0.0
        %426 = vmatprep.subr.mxu0 0.0
        %427 = vmatpush1.msra.mxu0 0.0
        %428 = vmatprep.subr.mxu0 0.0
        %429 = vmatpush1.msra.mxu0 0.0
        %430 = vmatprep.subr.mxu0 0.0
        %431 = vmatpush1.msra.mxu0 0.0
        %432 = vmatprep.subr.mxu0 0.0
        %433 = vmatpush1.msra.mxu0 0.0
        %434 = vmatprep.subr.mxu0 0.0
        %435 = vmatpush1.msra.mxu0 0.0
        %436 = vmatprep.subr.mxu0 0.0
        %437 = vmatpush1.msra.mxu0 0.0
        %438 = vmatprep.subr.mxu0 0.0
        %439 = vmatpush1.msra.mxu0 0.0
        %440 = vmatprep.mubr.f32.mxu0 0.0
        %441 = vmatmul.mubr.f32.gmra.mrb[0].mxu0 %v359
        %v442 = vpop.f32.mrb[0].mxu0
        %v443 = vadd.f32 0.0, %v442
        %v444 = vpop.f32.mrb[0].mxu0
        %445 = vdwg.mxu0
        %447 = vset.pattern.permute.xlu0 0
        %448 = vperm.xlu0 %447, %v358
        %v449 = vpop.permute.xlu0 %448
        %v451 = vmul.f32 %v443, %v449
        %v452 = vld [vmem:[#allocation8] sm:$0x1]
        %v454 = vlaneseq
        %v455 = vshrl.u32 %v454, 7
        %v456 = vsub.s32 0, %v455
        %v457 = vrot.slane %v452, %v456
        %v459 = vadd.f32 %v451, %v457
        %v460 = vmul.f32 %v459, 0.01
        %v461 = vmax.f32 %v459, %v460
        %v462 = vld [vmem:[#allocation10] sm:$0xff]
        %v463 = vld [vmem:[#allocation10 + $0x8] sm:$0xff]
        %v464 = vld [vmem:[#allocation10 + $0x10] sm:$0xff]
        %v465 = vld [vmem:[#allocation10 + $0x18] sm:$0xff]
        %v466 = vld [vmem:[#allocation10 + $0x20] sm:$0xff]
        %v467 = vld [vmem:[#allocation10 + $0x28] sm:$0xff]
        %v468 = vld [vmem:[#allocation10 + $0x30] sm:$0xff]
        %v469 = vld [vmem:[#allocation10 + $0x38] sm:$0xff]
        %v470 = vld [vmem:[#allocation10 + $0x40] sm:$0xff]
        %v471 = vld [vmem:[#allocation10 + $0x48] sm:$0xff]
        %v472 = vld [vmem:[#allocation10 + $0x50] sm:$0xff]
        %v473 = vld [vmem:[#allocation10 + $0x58] sm:$0xff]
        %v474 = vld [vmem:[#allocation10 + $0x60] sm:$0xff]
        %v475 = vld [vmem:[#allocation10 + $0x68] sm:$0xff]
        %v476 = vld [vmem:[#allocation10 + $0x70] sm:$0xff]
        %v477 = vld [vmem:[#allocation10 + $0x78] sm:$0xff]
        %478 = vmatprep.subr.mxu0 0.0
        %479 = vmatpush1.msra.mxu0 %v462
        %480 = vmatprep.subr.mxu0 0.0
        %481 = vmatpush1.msra.mxu0 %v463
        %482 = vmatprep.subr.mxu0 0.0
        %483 = vmatpush1.msra.mxu0 %v464
        %484 = vmatprep.subr.mxu0 0.0
        %485 = vmatpush1.msra.mxu0 %v465
        %486 = vmatprep.subr.mxu0 0.0
        %487 = vmatpush1.msra.mxu0 %v466
        %488 = vmatprep.subr.mxu0 0.0
        %489 = vmatpush1.msra.mxu0 %v467
        %490 = vmatprep.subr.mxu0 0.0
        %491 = vmatpush1.msra.mxu0 %v468
        %492 = vmatprep.subr.mxu0 0.0
        %493 = vmatpush1.msra.mxu0 %v469
        %494 = vmatprep.subr.mxu0 0.0
        %495 = vmatpush1.msra.mxu0 %v470
        %496 = vmatprep.subr.mxu0 0.0
        %497 = vmatpush1.msra.mxu0 %v471
        %498 = vmatprep.subr.mxu0 0.0
        %499 = vmatpush1.msra.mxu0 %v472
        %500 = vmatprep.subr.mxu0 0.0
        %501 = vmatpush1.msra.mxu0 %v473
        %502 = vmatprep.subr.mxu0 0.0
        %503 = vmatpush1.msra.mxu0 %v474
        %504 = vmatprep.subr.mxu0 0.0
        %505 = vmatpush1.msra.mxu0 %v475
        %506 = vmatprep.subr.mxu0 0.0
        %507 = vmatpush1.msra.mxu0 %v476
        %508 = vmatprep.subr.mxu0 0.0
        %509 = vmatpush1.msra.mxu0 %v477
        %510 = vmatprep.subr.mxu0 0.0
        %511 = vmatpush1.msra.mxu0 0.0
        %512 = vmatprep.subr.mxu0 0.0
        %513 = vmatpush1.msra.mxu0 0.0
        %514 = vmatprep.subr.mxu0 0.0
        %515 = vmatpush1.msra.mxu0 0.0
        %516 = vmatprep.subr.mxu0 0.0
        %517 = vmatpush1.msra.mxu0 0.0
        %518 = vmatprep.subr.mxu0 0.0
        %519 = vmatpush1.msra.mxu0 0.0
        %520 = vmatprep.subr.mxu0 0.0
        %521 = vmatpush1.msra.mxu0 0.0
        %522 = vmatprep.subr.mxu0 0.0
        %523 = vmatpush1.msra.mxu0 0.0
        %524 = vmatprep.subr.mxu0 0.0
        %525 = vmatpush1.msra.mxu0 0.0
        %526 = vmatprep.subr.mxu0 0.0
        %527 = vmatpush1.msra.mxu0 0.0
        %528 = vmatprep.subr.mxu0 0.0
        %529 = vmatpush1.msra.mxu0 0.0
        %530 = vmatprep.subr.mxu0 0.0
        %531 = vmatpush1.msra.mxu0 0.0
        %532 = vmatprep.subr.mxu0 0.0
        %533 = vmatpush1.msra.mxu0 0.0
        %534 = vmatprep.subr.mxu0 0.0
        %535 = vmatpush1.msra.mxu0 0.0
        %536 = vmatprep.subr.mxu0 0.0
        %537 = vmatpush1.msra.mxu0 0.0
        %538 = vmatprep.subr.mxu0 0.0
        %539 = vmatpush1.msra.mxu0 0.0
        %540 = vmatprep.subr.mxu0 0.0
        %541 = vmatpush1.msra.mxu0 0.0
        %542 = vmatprep.mubr.f32.mxu0 0.0
        %543 = vmatmul.mubr.f32.gmra.mrb[0].mxu0 %v461
        %v544 = vpop.f32.mrb[0].mxu0
        %v545 = vadd.f32 0.0, %v544
        %v546 = vpop.f32.mrb[0].mxu0
        %547 = vdwg.mxu0
        %v548 = vmul.f32 %v545, %v449
        %v549 = vld [vmem:[#allocation11] sm:$0x1]
        %v551 = vlaneseq
        %v552 = vshrl.u32 %v551, 7
        %v553 = vsub.s32 0, %v552
        %v554 = vrot.slane %v549, %v553
        %v556 = vadd.f32 %v548, %v554
        %v557 = vmul.f32 %v556, 0.01
        %v558 = vmax.f32 %v556, %v557
        %v559 = vmul.f32 %v558, %v449
        %560 = vst [vmem:[%s357] sm:$0xff] %v559
        %s561 = sand.u32 %s172, 1
        %s562 = scalar_lea.sflag [#allocation4], %s561
        %s563 = sand.u32 %s172, 1
        %s564 = smul.addr %s563, 8
        %s565 = scalar_lea.vmem [#allocation13], %s564
        // Predicated region
        $region69: #{tpu_custom_call.1} parent=43 // pred_check
          %p566 = pneg %p182
        $region70: #{tpu_custom_call.1} parent=43 // pred_check_branch
          %568 = sbr.rel (%p566) target = $region72
        $region71: #{tpu_custom_call.1} parent=43 // pred_region
          %s570 = ssub.s32 128, 128
          %571 = vsyncadd %s562, %s570
          %s572 = smul.addr %s28, 128
          %s573 = scalar_lea.hbm %s6, %s572
          %s575 = sshll.u32 %s565, 4
          %s576 = int_to_ptr.vmem [resolvable:$true] %s575
          %578 = dma.vmem_to_hbm [thread:$0]  %s576, 128, %s573, %s562
        $region72: #{tpu_custom_call.1} parent=43 // pred_fallthru
          _
      $region44: #{tpu_custom_call.1} parent=5 // pred_fallthru
        _
      %p579 = scmp.le.s32.totalorder 2, %s23
      // Predicated region
      $region73: #{tpu_custom_call.1} parent=5 // pred_check
        %p580 = pneg %p579
      $region74: #{tpu_custom_call.1} parent=5 // pred_check_branch
        %582 = sbr.rel (%p580) target = $region76
      $region75: #{tpu_custom_call.1} parent=5 // pred_region
        %s583 = ssub.s32 %s23, 2
        // Predicated region
        $region77: #{tpu_custom_call.1} parent=75 // pred_check
          %p584 = pneg %p188
        $region78: #{tpu_custom_call.1} parent=75 // pred_check_branch
          %586 = sbr.rel (%p584) target = $region80
        $region79: #{tpu_custom_call.1} parent=75 // pred_region
          %s587 = sand.u32 %s173, 1
          %s588 = scalar_lea.sflag [#allocation4], %s587
          %s589 = sand.u32 %s173, 1
          %s590 = smul.addr %s589, 8
          %s591 = scalar_lea.vmem [#allocation13], %s590
          %592 = dma.done %s588, 128
        $region80: #{tpu_custom_call.1} parent=75 // pred_fallthru
          _
      $region76: #{tpu_custom_call.1} parent=5 // pred_fallthru
        _
    $region6: #{tpu_custom_call.1} parent=1 // loop_footer
      %s27 = sadd.s32 1, %s23
    $region7: #{tpu_custom_call.1} parent=1 // loop_footer_branch
      %22 = sbr.rel target = $region3
    $region8: #{tpu_custom_call.1} parent=1 // loop_exit
      _
    %593 = vsyncpa [#allocation3], 1
    %s594 = scalar_lea.sflag [#allocation3], 1
    %595 = vsyncpa %s594, 1
    %596 = vsyncpa [#allocation6], 1
    %s597 = scalar_lea.sflag [#allocation6], 1
    %598 = vsyncpa %s597, 1
    %599 = vsyncpa [#allocation9], 1
    %600 = vsyncpa [#allocation12], 1
    %601 = vsyncpa [#allocation4], 1
    %s602 = scalar_lea.sflag [#allocation4], 1
    %603 = vsyncpa %s602, 1

</llo_original>
